<compile_context>
chip_gen: v7x
topology: tpu7x:2x2x1
jax: 0.10.0
libtpu: 0.0.40
codegen_flags: <defaults>
</compile_context>

<pallas_src>
import jax
import jax.numpy as jnp
import numpy as np
from jax.experimental import pallas as pl
from jax.experimental.pallas import tpu as pltpu

GROUPS = 4
NEG_SLOPE = 0.1


# --------------------------------------------------------------------------
# Generation-aware VMEM budgeting
# --------------------------------------------------------------------------
def _round_up(a, m):
    return ((a + m - 1) // m) * m


def _vmem_limit_bytes():
    try:
        cap = int(pltpu.get_tpu_info().vmem_capacity_bytes)
    except Exception:
        cap = 64 * 1024 * 1024          # conservative (v7x-sized) fallback
    return int(min(cap // 2, 96 * 1024 * 1024))


_VMEM_LIMIT = _vmem_limit_bytes()


def _choose_row_tile(H, W, C, budget_bytes):
    """Largest row tile TH (multiple of 8, capped at round_up(H, 8)) whose
    conservative per-step VMEM footprint fits the budget."""
    Ws = W + 4
    h_max = _round_up(H, 8)

    def footprint(th):
        r1 = th + 2
        b = 4 * C * Ws * (2 * (th + 4)      # x_win block, double-buffered
                          + 2 * th          # output block, double-buffered
                          + r1              # conv1 intermediate scratch slab
                          + 9 * r1          # per-ky (3C, r1*Ws) patch
                          + 3 * r1)         # acc / mid / residual working vals
        b += 4 * 4 * 9 * C * C              # both dense per-ky weights (x2 buf)
        return b

    best = 8
    th = 8
    while th <= h_max:
        if footprint(th) <= budget_bytes:
            best = th
        th += 8
    return min(best, h_max)


# --------------------------------------------------------------------------
# Fused Pallas kernel (lane-dense: C on sublanes, flat spatial on lanes)
# --------------------------------------------------------------------------
def _make_resb_kernel(C, TH, W):
    Ws = W + 4                      # padded row stride (2 zero cols each side)
    R1 = TH + 2                     # intermediate rows needed by this tile
    Lm = R1 * Ws - 2                # flat extent of the conv1 intermediate
    Lo = TH * Ws - 4                # flat extent of the conv2 output

    def kernel(xw_ref, mask_ref, w1_ref, b1_ref, w2_ref, b2_ref, o_ref, mp_ref):
        # xw_ref  : (C, (TH+4)*Ws)  flattened padded input window (VMEM)
        # mask_ref: (1, Lm)         validity mask for the conv1 intermediate
        # w*_ref  : (3, C, 3*C)     dense block-diagonal per-ky weights
        # b*_ref  : (C, 1)
        # o_ref   : (C, Lo)         flattened output tile
        # mp_ref  : (C, Lm) f32     VMEM scratch: conv1 intermediate

        # ---- conv1: 3 matmuls (one per ky), K = 3*C, lanes = Lm ------------
        acc = None
        for ky in range(3):
            base = ky * Ws
            patch = jnp.concatenate(
                [xw_ref[:, base + kx:base + kx + Lm] for kx in range(3)],
                axis=0)                                        # (3C, Lm)
            d = jnp.dot(w1_ref[ky], patch,
                        preferred_element_type=jnp.float32)     # (C, Lm)
            acc = d if acc is None else acc + d
        acc = acc + b1_ref[...]
        mid = jnp.maximum(acc, NEG_SLOPE * acc)                 # LeakyReLU(0.1)

        # Zero the conv-padding columns and out-of-image rows of the
        # intermediate (mask precomputed per row tile in the wrapper), then
        # park it in VMEM for conv2.
        mp_ref[...] = mid * mask_ref[...]

        # ---- conv2 + bias + residual ---------------------------------------
        acc = None
        for ky in range(3):
            base = ky * Ws
            patch = jnp.concatenate(
                [mp_ref[:, base + kx:base + kx + Lo] for kx in range(3)],
                axis=0)                                        # (3C, Lo)
            d = jnp.dot(w2_ref[ky], patch,
                        preferred_element_type=jnp.float32)     # (C, Lo)
            acc = d if acc is None else acc + d

        res = xw_ref[:, 2 * Ws + 2:2 * Ws + 2 + Lo]             # residual = x
        o_ref[...] = acc + b2_ref[...] + res

    return kernel


# --------------------------------------------------------------------------
# Wrapper helpers
# --------------------------------------------------------------------------
def grouped_weight_to_dense(w, groups=GROUPS):
    """PyTorch grouped Conv2d weight (C_out, C_in//g, 3, 3) -> dense per-ky
    matrices (3, C_out, 3*C_in), block-diagonal over groups.  The K axis is
    laid out as kx*C_in + c_in, matching the kernel's kx patch concat."""
    c_out, cg_in, kh, kw = w.shape
    cg_out = c_out // groups
    c_in = cg_in * groups
    dense = jnp.zeros((kh, c_out, kw * c_in), jnp.float32)
    for g in range(groups):
        blk = w[g * cg_out:(g + 1) * cg_out].astype(jnp.float32)
        for kx in range(kw):
            sub = jnp.transpose(blk[:, :, :, kx], (2, 0, 1))     # (3, cgO, cgI)
            dense = dense.at[:, g * cg_out:(g + 1) * cg_out,
                             kx * c_in + g * cg_in:
                             kx * c_in + (g + 1) * cg_in].set(sub)
    return dense


@jax.jit
def resb_forward(x, w1d, b1, w2d, b2):
    """ResB forward. x: (N, C, H, W) f32, w{1,2}d: (3, C, 3C) dense weights."""
    N, C, H, W = x.shape
    Ws = W + 4
    TH = _choose_row_tile(H, W, C, _VMEM_LIMIT // 2)
    n_t = -(-H // TH)                      # cdiv, no divisor requirement on H
    H_pad = n_t * TH
    R1 = TH + 2
    Lwin = (TH + 4) * Ws
    Lm = R1 * Ws - 2
    Lo = TH * Ws - 4

    x = x.astype(jnp.float32)
    # zero-pad: 2 rows above, (H_pad - H + 2) rows below, 2 columns each side
    xp = jnp.pad(x, ((0, 0), (0, 0), (2, H_pad - H + 2), (2, 2)))
    # overlapping (TH+4)-row windows; spatial flattened onto the lane axis
    x_win = jnp.stack(
        [xp[:, :, t * TH:t * TH + TH + 4, :] for t in range(n_t)],
        axis=1).reshape(N, n_t, C, Lwin)

    # Per-row-tile validity mask for the conv1 intermediate: zero at the
    # conv-padding columns and at rows outside the real image (handles the
    # image top/bottom border and the padded tail tile).
    q = np.arange(Lm) + 1
    col = q % Ws
    row = q // Ws
    mask_np = np.stack(
        [((col >= 2) & (col <= W + 1)
          & (t * TH - 1 + row >= 0) & (t * TH - 1 + row < H))
         for t in range(n_t)]).astype(np.float32)
    mask = jnp.asarray(mask_np).reshape(n_t, 1, Lm)

    b1r = b1.reshape(C, 1).astype(jnp.float32)
    b2r = b2.reshape(C, 1).astype(jnp.float32)
    w1f = w1d.astype(jnp.float32)
    w2f = w2d.astype(jnp.float32)

    flops = 4 * 9 * C * C * N * H_pad * W           # two convs, dense CxC taps
    bytes_accessed = int(4 * (x_win.size + N * n_t * C * Lo + mask.size
                              + w1f.size + w2f.size + 2 * C))

    out = pl.pallas_call(
        _make_resb_kernel(C, TH, W),
        out_shape=jax.ShapeDtypeStruct((N, n_t, C, Lo), jnp.float32),
        grid=(N, n_t),
        in_specs=[
            pl.BlockSpec((None, None, C, Lwin), lambda n, t: (n, t, 0, 0)),
            pl.BlockSpec((None, 1, Lm), lambda n, t: (t, 0, 0)),
            pl.BlockSpec((3, C, 3 * C), lambda n, t: (0, 0, 0)),
            pl.BlockSpec((C, 1), lambda n, t: (0, 0)),
            pl.BlockSpec((3, C, 3 * C), lambda n, t: (0, 0, 0)),
            pl.BlockSpec((C, 1), lambda n, t: (0, 0)),
        ],
        out_specs=pl.BlockSpec((None, None, C, Lo), lambda n, t: (n, t, 0, 0)),
        scratch_shapes=[pltpu.VMEM((C, Lm), jnp.float32)],
        compiler_params=pltpu.CompilerParams(
            dimension_semantics=("parallel", "parallel"),
            vmem_limit_bytes=_VMEM_LIMIT),
        cost_estimate=pl.CostEstimate(flops=flops, transcendentals=0,
                                      bytes_accessed=bytes_accessed),
    )(x_win, mask, w1f, b1r, w2f, b2r)

    # un-tile: (N, n_t, C, Lo) -> (N, C, H, W)
    out = jnp.pad(out, ((0, 0), (0, 0), (0, 0), (2, 2)))     # -> (..., TH*Ws)
    out = out.reshape(N, n_t, C, TH, Ws).transpose(0, 2, 1, 3, 4)
    out = out.reshape(N, C, H_pad, Ws)
    return out[:, :, :H, 2:W + 2]


# --------------------------------------------------------------------------
# Pure-JAX reference (for correctness check)
# --------------------------------------------------------------------------
def resb_reference(x_nchw, w1, b1, w2, b2):
    def conv(x, w, b):
        y = jax.lax.conv_general_dilated(
            x, w, window_strides=(1, 1), padding=((1, 1), (1, 1)),
            dimension_numbers=("NCHW", "OIHW", "NCHW"),
            feature_group_count=GROUPS)
        return y + b[None, :, None, None]

    h = conv(x_nchw, w1, b1)
    h = jnp.where(h > 0, h, NEG_SLOPE * h)
    return conv(h, w2, b2) + x_nchw


# --------------------------------------------------------------------------
if __name__ == "__main__":
    N, C, H, W = 2, 8, 16, 16                 # channels must be divisible by 4
    Cg = C // GROUPS

    key = jax.random.PRNGKey(0)
    k1, k2, k3, k4, kx = jax.random.split(key, 5)

    # PyTorch Conv2d weight layout: (O, I/groups, 3, 3)
    w1 = jax.random.normal(k1, (C, Cg, 3, 3), jnp.float32) * 0.1
    b1 = jax.random.normal(k2, (C,), jnp.float32) * 0.1
    w2 = jax.random.normal(k3, (C, Cg, 3, 3), jnp.float32) * 0.1
    b2 = jax.random.normal(k4, (C,), jnp.float32) * 0.1

    x = jax.random.normal(kx, (N, C, H, W), jnp.float32)

    # Dense (block-diagonal) per-ky weights consumed by the kernel.
    w1d = grouped_weight_to_dense(w1)          # (3, C, 3C)
    w2d = grouped_weight_to_dense(w2)          # (3, C, 3C)

    out = jax.block_until_ready(resb_forward(x, w1d, b1, w2d, b2))
    ref = jax.block_until_ready(resb_reference(x, w1, b1, w2, b2))

    assert out.shape == (N, C, H, W)
    err = float(jnp.max(jnp.abs(out - ref)))
    assert jnp.allclose(out, ref, atol=5e-4, rtol=5e-4), err

    print("KERNEL_OK")
</pallas_src>

<mosaic_0001>
module attributes {stable_mosaic.version = 11 : i64} {
  func.func @kernel(%arg0: i32, %arg1: i32, %arg2: memref<1x1x8x400xf32, #tpu.memory_space<vmem>>, %arg3: memref<1x1x358xf32, #tpu.memory_space<vmem>>, %arg4: memref<3x8x24xf32, #tpu.memory_space<vmem>>, %arg5: memref<8x1xf32, #tpu.memory_space<vmem>>, %arg6: memref<3x8x24xf32, #tpu.memory_space<vmem>>, %arg7: memref<8x1xf32, #tpu.memory_space<vmem>>, %arg8: memref<1x1x8x316xf32, #tpu.memory_space<vmem>>, %arg9: memref<8x358xf32, #tpu.memory_space<vmem>>) attributes {dimension_semantics = [#tpu.dimension_semantics<parallel>, #tpu.dimension_semantics<parallel>], iteration_bounds = array<i64: 2, 1>, scalar_prefetch = 0 : i64, scratch_operands = 1 : i64, tpu.core_type = #tpu.core_type<tc>, window_params = [{transform_indices = @transform_0, window_bounds = array<i64: 1, 1, 8, 400>}, {transform_indices = @transform_1, window_bounds = array<i64: 1, 1, 358>}, {pipeline_mode = #tpu.pipeline_mode<synchronous>, transform_indices = @transform_2, window_bounds = array<i64: 3, 8, 24>}, {pipeline_mode = #tpu.pipeline_mode<synchronous>, transform_indices = @transform_3, window_bounds = array<i64: 8, 1>}, {pipeline_mode = #tpu.pipeline_mode<synchronous>, transform_indices = @transform_4, window_bounds = array<i64: 3, 8, 24>}, {pipeline_mode = #tpu.pipeline_mode<synchronous>, transform_indices = @transform_5, window_bounds = array<i64: 8, 1>}, {transform_indices = @transform_6, window_bounds = array<i64: 1, 1, 8, 316>}]} {
    %c0 = arith.constant 0 : index
    %c0_0 = arith.constant 0 : index
    %c0_1 = arith.constant 0 : index
    %c0_2 = arith.constant 0 : index
    %0 = vector.load %arg2[%c0, %c0_0, %c0_1, %c0_2] : memref<1x1x8x400xf32, #tpu.memory_space<vmem>>, vector<1x1x8x358xf32>
    %1 = vector.shape_cast %0 : vector<1x1x8x358xf32> to vector<8x358xf32>
    %c0_3 = arith.constant 0 : index
    %c0_4 = arith.constant 0 : index
    %c0_5 = arith.constant 0 : index
    %c1 = arith.constant 1 : index
    %2 = vector.load %arg2[%c0_3, %c0_4, %c0_5, %c1] : memref<1x1x8x400xf32, #tpu.memory_space<vmem>>, vector<1x1x8x358xf32>
    %3 = vector.shape_cast %2 : vector<1x1x8x358xf32> to vector<8x358xf32>
    %c0_6 = arith.constant 0 : index
    %c0_7 = arith.constant 0 : index
    %c0_8 = arith.constant 0 : index
    %c2 = arith.constant 2 : index
    %4 = vector.load %arg2[%c0_6, %c0_7, %c0_8, %c2] : memref<1x1x8x400xf32, #tpu.memory_space<vmem>>, vector<1x1x8x358xf32>
    %5 = vector.shape_cast %4 : vector<1x1x8x358xf32> to vector<8x358xf32>
    %6 = tpu.concatenate %1, %3, %5 in 0 : vector<8x358xf32>, vector<8x358xf32>, vector<8x358xf32> -> vector<24x358xf32>
    %c0_9 = arith.constant 0 : index
    %c0_10 = arith.constant 0 : index
    %c0_11 = arith.constant 0 : index
    %7 = vector.load %arg4[%c0_9, %c0_10, %c0_11] : memref<3x8x24xf32, #tpu.memory_space<vmem>>, vector<1x8x24xf32>
    %8 = vector.shape_cast %7 : vector<1x8x24xf32> to vector<8x24xf32>
    %cst = arith.constant dense<0.000000e+00> : vector<8x358xf32>
    %9 = tpu.matmul %8, %6, %cst {dimension_numbers = #tpu.dot_dimension_numbers<[1], [0], [0], [1], [0, 0, 1, 1], [], []>} : vector<8x24xf32>, vector<24x358xf32>, vector<8x358xf32> -> vector<8x358xf32>
    %c0_12 = arith.constant 0 : index
    %c0_13 = arith.constant 0 : index
    %c0_14 = arith.constant 0 : index
    %c20 = arith.constant 20 : index
    %10 = vector.load %arg2[%c0_12, %c0_13, %c0_14, %c20] : memref<1x1x8x400xf32, #tpu.memory_space<vmem>>, vector<1x1x8x358xf32>
    %11 = vector.shape_cast %10 : vector<1x1x8x358xf32> to vector<8x358xf32>
    %c0_15 = arith.constant 0 : index
    %c0_16 = arith.constant 0 : index
    %c0_17 = arith.constant 0 : index
    %c21 = arith.constant 21 : index
    %12 = vector.load %arg2[%c0_15, %c0_16, %c0_17, %c21] : memref<1x1x8x400xf32, #tpu.memory_space<vmem>>, vector<1x1x8x358xf32>
    %13 = vector.shape_cast %12 : vector<1x1x8x358xf32> to vector<8x358xf32>
    %c0_18 = arith.constant 0 : index
    %c0_19 = arith.constant 0 : index
    %c0_20 = arith.constant 0 : index
    %c22 = arith.constant 22 : index
    %14 = vector.load %arg2[%c0_18, %c0_19, %c0_20, %c22] : memref<1x1x8x400xf32, #tpu.memory_space<vmem>>, vector<1x1x8x358xf32>
    %15 = vector.shape_cast %14 : vector<1x1x8x358xf32> to vector<8x358xf32>
    %16 = tpu.concatenate %11, %13, %15 in 0 : vector<8x358xf32>, vector<8x358xf32>, vector<8x358xf32> -> vector<24x358xf32>
    %c1_21 = arith.constant 1 : index
    %c0_22 = arith.constant 0 : index
    %c0_23 = arith.constant 0 : index
    %17 = vector.load %arg4[%c1_21, %c0_22, %c0_23] : memref<3x8x24xf32, #tpu.memory_space<vmem>>, vector<1x8x24xf32>
    %18 = vector.shape_cast %17 : vector<1x8x24xf32> to vector<8x24xf32>
    %cst_24 = arith.constant dense<0.000000e+00> : vector<8x358xf32>
    %19 = tpu.matmul %18, %16, %cst_24 {dimension_numbers = #tpu.dot_dimension_numbers<[1], [0], [0], [1], [0, 0, 1, 1], [], []>} : vector<8x24xf32>, vector<24x358xf32>, vector<8x358xf32> -> vector<8x358xf32>
    %20 = arith.addf %9, %19 : vector<8x358xf32>
    %c0_25 = arith.constant 0 : index
    %c0_26 = arith.constant 0 : index
    %c0_27 = arith.constant 0 : index
    %c40 = arith.constant 40 : index
    %21 = vector.load %arg2[%c0_25, %c0_26, %c0_27, %c40] : memref<1x1x8x400xf32, #tpu.memory_space<vmem>>, vector<1x1x8x358xf32>
    %22 = vector.shape_cast %21 : vector<1x1x8x358xf32> to vector<8x358xf32>
    %c0_28 = arith.constant 0 : index
    %c0_29 = arith.constant 0 : index
    %c0_30 = arith.constant 0 : index
    %c41 = arith.constant 41 : index
    %23 = vector.load %arg2[%c0_28, %c0_29, %c0_30, %c41] : memref<1x1x8x400xf32, #tpu.memory_space<vmem>>, vector<1x1x8x358xf32>
    %24 = vector.shape_cast %23 : vector<1x1x8x358xf32> to vector<8x358xf32>
    %c0_31 = arith.constant 0 : index
    %c0_32 = arith.constant 0 : index
    %c0_33 = arith.constant 0 : index
    %c42 = arith.constant 42 : index
    %25 = vector.load %arg2[%c0_31, %c0_32, %c0_33, %c42] : memref<1x1x8x400xf32, #tpu.memory_space<vmem>>, vector<1x1x8x358xf32>
    %26 = vector.shape_cast %25 : vector<1x1x8x358xf32> to vector<8x358xf32>
    %27 = tpu.concatenate %22, %24, %26 in 0 : vector<8x358xf32>, vector<8x358xf32>, vector<8x358xf32> -> vector<24x358xf32>
    %c2_34 = arith.constant 2 : index
    %c0_35 = arith.constant 0 : index
    %c0_36 = arith.constant 0 : index
    %28 = vector.load %arg4[%c2_34, %c0_35, %c0_36] : memref<3x8x24xf32, #tpu.memory_space<vmem>>, vector<1x8x24xf32>
    %29 = vector.shape_cast %28 : vector<1x8x24xf32> to vector<8x24xf32>
    %cst_37 = arith.constant dense<0.000000e+00> : vector<8x358xf32>
    %30 = tpu.matmul %29, %27, %cst_37 {dimension_numbers = #tpu.dot_dimension_numbers<[1], [0], [0], [1], [0, 0, 1, 1], [], []>} : vector<8x24xf32>, vector<24x358xf32>, vector<8x358xf32> -> vector<8x358xf32>
    %31 = arith.addf %20, %30 : vector<8x358xf32>
    %c0_38 = arith.constant 0 : index
    %c0_39 = arith.constant 0 : index
    %32 = vector.load %arg5[%c0_38, %c0_39] : memref<8x1xf32, #tpu.memory_space<vmem>>, vector<8x1xf32>
    %33 = vector.broadcast %32 : vector<8x1xf32> to vector<8x358xf32>
    %34 = arith.addf %31, %33 : vector<8x358xf32>
    %cst_40 = arith.constant 1.000000e-01 : f32
    %35 = vector.broadcast %cst_40 : f32 to vector<8x358xf32>
    %36 = arith.mulf %35, %34 : vector<8x358xf32>
    %37 = arith.maximumf %34, %36 : vector<8x358xf32>
    %c0_41 = arith.constant 0 : index
    %c0_42 = arith.constant 0 : index
    %c0_43 = arith.constant 0 : index
    %38 = vector.load %arg3[%c0_41, %c0_42, %c0_43] : memref<1x1x358xf32, #tpu.memory_space<vmem>>, vector<1x1x358xf32>
    %39 = vector.shape_cast %38 : vector<1x1x358xf32> to vector<1x358xf32>
    %40 = vector.broadcast %39 : vector<1x358xf32> to vector<8x358xf32>
    %41 = arith.mulf %37, %40 : vector<8x358xf32>
    %c0_44 = arith.constant 0 : index
    %c0_45 = arith.constant 0 : index
    %42 = vector.load %arg9[%c0_44, %c0_45] : memref<8x358xf32, #tpu.memory_space<vmem>>, vector<8x358xf32>
    tpu.vector_store %arg9[%c0_44, %c0_45], %41 {strides = array<i32>} : memref<8x358xf32, #tpu.memory_space<vmem>>, vector<8x358xf32>,
    %c0_46 = arith.constant 0 : index
    %c0_47 = arith.constant 0 : index
    %43 = vector.load %arg9[%c0_46, %c0_47] : memref<8x358xf32, #tpu.memory_space<vmem>>, vector<8x316xf32>
    %c0_48 = arith.constant 0 : index
    %c1_49 = arith.constant 1 : index
    %44 = vector.load %arg9[%c0_48, %c1_49] : memref<8x358xf32, #tpu.memory_space<vmem>>, vector<8x316xf32>
    %c0_50 = arith.constant 0 : index
    %c2_51 = arith.constant 2 : index
    %45 = vector.load %arg9[%c0_50, %c2_51] : memref<8x358xf32, #tpu.memory_space<vmem>>, vector<8x316xf32>
    %46 = tpu.concatenate %43, %44, %45 in 0 : vector<8x316xf32>, vector<8x316xf32>, vector<8x316xf32> -> vector<24x316xf32>
    %c0_52 = arith.constant 0 : index
    %c0_53 = arith.constant 0 : index
    %c0_54 = arith.constant 0 : index
    %47 = vector.load %arg6[%c0_52, %c0_53, %c0_54] : memref<3x8x24xf32, #tpu.memory_space<vmem>>, vector<1x8x24xf32>
    %48 = vector.shape_cast %47 : vector<1x8x24xf32> to vector<8x24xf32>
    %cst_55 = arith.constant dense<0.000000e+00> : vector<8x316xf32>
    %49 = tpu.matmul %48, %46, %cst_55 {dimension_numbers = #tpu.dot_dimension_numbers<[1], [0], [0], [1], [0, 0, 1, 1], [], []>} : vector<8x24xf32>, vector<24x316xf32>, vector<8x316xf32> -> vector<8x316xf32>
    %c0_56 = arith.constant 0 : index
    %c20_57 = arith.constant 20 : index
    %50 = vector.load %arg9[%c0_56, %c20_57] : memref<8x358xf32, #tpu.memory_space<vmem>>, vector<8x316xf32>
    %c0_58 = arith.constant 0 : index
    %c21_59 = arith.constant 21 : index
    %51 = vector.load %arg9[%c0_58, %c21_59] : memref<8x358xf32, #tpu.memory_space<vmem>>, vector<8x316xf32>
    %c0_60 = arith.constant 0 : index
    %c22_61 = arith.constant 22 : index
    %52 = vector.load %arg9[%c0_60, %c22_61] : memref<8x358xf32, #tpu.memory_space<vmem>>, vector<8x316xf32>
    %53 = tpu.concatenate %50, %51, %52 in 0 : vector<8x316xf32>, vector<8x316xf32>, vector<8x316xf32> -> vector<24x316xf32>
    %c1_62 = arith.constant 1 : index
    %c0_63 = arith.constant 0 : index
    %c0_64 = arith.constant 0 : index
    %54 = vector.load %arg6[%c1_62, %c0_63, %c0_64] : memref<3x8x24xf32, #tpu.memory_space<vmem>>, vector<1x8x24xf32>
    %55 = vector.shape_cast %54 : vector<1x8x24xf32> to vector<8x24xf32>
    %cst_65 = arith.constant dense<0.000000e+00> : vector<8x316xf32>
    %56 = tpu.matmul %55, %53, %cst_65 {dimension_numbers = #tpu.dot_dimension_numbers<[1], [0], [0], [1], [0, 0, 1, 1], [], []>} : vector<8x24xf32>, vector<24x316xf32>, vector<8x316xf32> -> vector<8x316xf32>
    %57 = arith.addf %49, %56 : vector<8x316xf32>
    %c0_66 = arith.constant 0 : index
    %c40_67 = arith.constant 40 : index
    %58 = vector.load %arg9[%c0_66, %c40_67] : memref<8x358xf32, #tpu.memory_space<vmem>>, vector<8x316xf32>
    %c0_68 = arith.constant 0 : index
    %c41_69 = arith.constant 41 : index
    %59 = vector.load %arg9[%c0_68, %c41_69] : memref<8x358xf32, #tpu.memory_space<vmem>>, vector<8x316xf32>
    %c0_70 = arith.constant 0 : index
    %c42_71 = arith.constant 42 : index
    %60 = vector.load %arg9[%c0_70, %c42_71] : memref<8x358xf32, #tpu.memory_space<vmem>>, vector<8x316xf32>
    %61 = tpu.concatenate %58, %59, %60 in 0 : vector<8x316xf32>, vector<8x316xf32>, vector<8x316xf32> -> vector<24x316xf32>
    %c2_72 = arith.constant 2 : index
    %c0_73 = arith.constant 0 : index
    %c0_74 = arith.constant 0 : index
    %62 = vector.load %arg6[%c2_72, %c0_73, %c0_74] : memref<3x8x24xf32, #tpu.memory_space<vmem>>, vector<1x8x24xf32>
    %63 = vector.shape_cast %62 : vector<1x8x24xf32> to vector<8x24xf32>
    %cst_75 = arith.constant dense<0.000000e+00> : vector<8x316xf32>
    %64 = tpu.matmul %63, %61, %cst_75 {dimension_numbers = #tpu.dot_dimension_numbers<[1], [0], [0], [1], [0, 0, 1, 1], [], []>} : vector<8x24xf32>, vector<24x316xf32>, vector<8x316xf32> -> vector<8x316xf32>
    %65 = arith.addf %57, %64 : vector<8x316xf32>
    %c0_76 = arith.constant 0 : index
    %c0_77 = arith.constant 0 : index
    %c0_78 = arith.constant 0 : index
    %c42_79 = arith.constant 42 : index
    %66 = vector.load %arg2[%c0_76, %c0_77, %c0_78, %c42_79] : memref<1x1x8x400xf32, #tpu.memory_space<vmem>>, vector<1x1x8x316xf32>
    %67 = vector.shape_cast %66 : vector<1x1x8x316xf32> to vector<8x316xf32>
    %c0_80 = arith.constant 0 : index
    %c0_81 = arith.constant 0 : index
    %68 = vector.load %arg7[%c0_80, %c0_81] : memref<8x1xf32, #tpu.memory_space<vmem>>, vector<8x1xf32>
    %69 = vector.broadcast %68 : vector<8x1xf32> to vector<8x316xf32>
    %70 = arith.addf %65, %69 : vector<8x316xf32>
    %71 = arith.addf %70, %67 : vector<8x316xf32>
    %c0_82 = arith.constant 0 : index
    %c0_83 = arith.constant 0 : index
    %c0_84 = arith.constant 0 : index
    %c0_85 = arith.constant 0 : index
    %72 = vector.load %arg8[%c0_82, %c0_83, %c0_84, %c0_85] : memref<1x1x8x316xf32, #tpu.memory_space<vmem>>, vector<1x1x8x316xf32>
    %73 = vector.shape_cast %72 : vector<1x1x8x316xf32> to vector<8x316xf32>
    %74 = vector.shape_cast %71 : vector<8x316xf32> to vector<1x1x8x316xf32>
    tpu.vector_store %arg8[%c0_82, %c0_83, %c0_84, %c0_85], %74 {strides = array<i32>} : memref<1x1x8x316xf32, #tpu.memory_space<vmem>>, vector<1x1x8x316xf32>,
    return
  }
  func.func @transform_0(%arg0: i32, %arg1: i32) -> (i32, i32, i32, i32) {
    %c0_i32 = arith.constant 0 : i32
    %c0_i32_0 = arith.constant 0 : i32
    %c0_i32_1 = arith.constant 0 : i32
    return %arg0, %arg1, %c0_i32, %c0_i32_0 : i32, i32, i32, i32
  }
  func.func @transform_1(%arg0: i32, %arg1: i32) -> (i32, i32, i32) {
    %c0_i32 = arith.constant 0 : i32
    %c0_i32_0 = arith.constant 0 : i32
    %c0_i32_1 = arith.constant 0 : i32
    return %arg1, %c0_i32, %c0_i32_0 : i32, i32, i32
  }
  func.func @transform_2(%arg0: i32, %arg1: i32) -> (i32, i32, i32) {
    %c0_i32 = arith.constant 0 : i32
    %c0_i32_0 = arith.constant 0 : i32
    %c0_i32_1 = arith.constant 0 : i32
    %c0_i32_2 = arith.constant 0 : i32
    return %c0_i32, %c0_i32_0, %c0_i32_1 : i32, i32, i32
  }
  func.func @transform_3(%arg0: i32, %arg1: i32) -> (i32, i32) {
    %c0_i32 = arith.constant 0 : i32
    %c0_i32_0 = arith.constant 0 : i32
    %c0_i32_1 = arith.constant 0 : i32
    return %c0_i32, %c0_i32_0 : i32, i32
  }
  func.func @transform_4(%arg0: i32, %arg1: i32) -> (i32, i32, i32) {
    %c0_i32 = arith.constant 0 : i32
    %c0_i32_0 = arith.constant 0 : i32
    %c0_i32_1 = arith.constant 0 : i32
    %c0_i32_2 = arith.constant 0 : i32
    return %c0_i32, %c0_i32_0, %c0_i32_1 : i32, i32, i32
  }
  func.func @transform_5(%arg0: i32, %arg1: i32) -> (i32, i32) {
    %c0_i32 = arith.constant 0 : i32
    %c0_i32_0 = arith.constant 0 : i32
    %c0_i32_1 = arith.constant 0 : i32
    return %c0_i32, %c0_i32_0 : i32, i32
  }
  func.func @transform_6(%arg0: i32, %arg1: i32) -> (i32, i32, i32, i32) {
    %c0_i32 = arith.constant 0 : i32
    %c0_i32_0 = arith.constant 0 : i32
    %c0_i32_1 = arith.constant 0 : i32
    return %arg0, %arg1, %c0_i32, %c0_i32_0 : i32, i32, i32, i32
  }
}

</mosaic_0001>

<llo_original>
// kernel: resb_forward.1
$region0: #{resb_forward.1}
  #allocation0 [shape = 'u32[]', space=smem, size = 0x4, offset = 0x4, fixed_abs, tag = 'smem constant byte address 0x4 - core index']
  #allocation1 [shape = 'u32[144,128]{1,0:T(1,128)}', space=vmem, size = 0x12000, scoped, tag = 'internal scratch']
  #allocation2 [shape = 'f32[8,358]{1,0:T(8,128)}', space=vmem, size = 0x3000, scoped, tag = 'scratch operand']
  %s0 = inlined_call_operand.vmem [shape: f32[2,1,8,400], index: 0, kind: input, shape index: {}]
  %s1 = inlined_call_operand.vmem [shape: f32[1,1,358], index: 1, kind: input, shape index: {}]
  %s2 = inlined_call_operand.vmem [shape: f32[3,8,24], index: 2, kind: input, shape index: {}]
  %s3 = inlined_call_operand.vmem [shape: f32[8,1], index: 3, kind: input, shape index: {}]
  %s4 = inlined_call_operand.vmem [shape: f32[3,8,24], index: 4, kind: input, shape index: {}]
  %s5 = inlined_call_operand.vmem [shape: f32[8,1], index: 5, kind: input, shape index: {}]
  %s6 = inlined_call_operand.vmem [shape: f32[2,1,8,316], index: 6, kind: output, shape index: {}]
  %s7 = sld [smem:[#allocation0]]
  $region57: #{resb_forward.1} parent=0
    _
  %s9 = ssub.s32 1, %s7
  %s10 = scalar_select 0, %s9, %s7
  loop: start=0, step=1, limit=4
  $region2: #{resb_forward.1} parent=0 // loop_pre_header
    _
  $region3: #{resb_forward.1} parent=0 // loop_header
    %s12 = sphi 0, %s16
    %p13 = scmp.ge.s32.totalorder %s12, 4
    %s19 = sphi 0, %s31
    %s20 = sphi 0, %s27
    %s21 = sphi 0, %s19
    %s22 = sphi 0, %s20
    %s23 = sphi 0, %s21
    %s24 = sphi 0, %s22
    %s36 = sphi 0, %s38
    %s39 = sphi 0, %s36
    %s40 = sphi 0, %s39
    %s56 = sphi 0, %s40
    %s62 = sphi 0, %s64
    %s65 = sphi 0, %s62
    %s66 = sphi 0, %s65
    %s82 = sphi 0, %s66
    %s86 = sphi 0, %s86
    %s88 = sphi 0, %s86
    %s89 = sphi 0, %s88
    %s103 = sphi 0, %s89
    %s107 = sphi 0, %s107
    %s109 = sphi 0, %s107
    %s110 = sphi 0, %s109
    %s124 = sphi 0, %s110
    %s128 = sphi 0, %s128
    %s130 = sphi 0, %s128
    %s131 = sphi 0, %s130
    %s145 = sphi 0, %s131
    %s149 = sphi 0, %s149
    %s151 = sphi 0, %s149
    %s152 = sphi 0, %s151
    %s166 = sphi 0, %s152
    %s174 = sphi 0, %s176
    %s177 = sphi 0, %s174
    %s178 = sphi 0, %s177
    %s194 = sphi 0, %s178
  $region4: #{resb_forward.1} parent=0 // loop_header_branch
    %15 = sbr.rel (%p13) target = $region8
  $region5: #{resb_forward.1} parent=0 // loop_body
    %s17 = ssub.s32 %s12, 1
    %s18 = ssub.s32 %s12, 2
    %s25 = sadd.s32 1, %s20
    %p26 = scmp.ge.s32.totalorder %s25, 1
    %s27 = scalar_select %p26, 0, %s25
    %s28 = sadd.s32 1, %s19
    %s29 = scalar_select %p26, %s28, %s19
    %p30 = scmp.ge.s32.totalorder %s29, 2
    %s31 = scalar_select %p30, 0, %s29
    %s32 = ssub.s32 %s19, %s31
    %s33 = ssub.s32 %s20, %s27
    %s34 = sor.u32 %s32, %s33
    %p35 = scmp.eq.s32.totalorder %s34, 0
    %s37 = sadd.s32 %s36, 1
    %s38 = scalar_select %p35, %s36, %s37
    %p41 = pneg %p35
    %p42 = scmp.eq.s32.totalorder %s12, 1
    %p43 = por %p41, %p42
    %p44 = scmp.ne.s32.totalorder %s36, %s39
    %p45 = scmp.eq.s32.totalorder %s12, 0
    %p46 = por %p44, %p45
    %p47 = scmp.ne.s32.totalorder %s36, %s39
    %p48 = scmp.eq.s32.totalorder %s17, 1
    %p49 = por %p47, %p48
    %p50 = scmp.ne.s32.totalorder %s39, %s40
    %p51 = scmp.eq.s32.totalorder %s17, 0
    %p52 = por %p50, %p51
    %p53 = scmp.ne.s32.totalorder %s39, %s40
    %p54 = scmp.eq.s32.totalorder %s18, 1
    %p55 = por %p53, %p54
    %p57 = scmp.ne.s32.totalorder %s40, %s56
    %p58 = scmp.eq.s32.totalorder %s18, 0
    %p59 = por %p57, %p58
    %s60 = ssub.s32 %s20, %s27
    %p61 = scmp.eq.s32.totalorder %s60, 0
    %s63 = sadd.s32 %s62, 1
    %s64 = scalar_select %p61, %s62, %s63
    %p67 = pneg %p61
    %p68 = scmp.eq.s32.totalorder %s12, 1
    %p69 = por %p67, %p68
    %p70 = scmp.ne.s32.totalorder %s62, %s65
    %p71 = scmp.eq.s32.totalorder %s12, 0
    %p72 = por %p70, %p71
    %p73 = scmp.ne.s32.totalorder %s62, %s65
    %p74 = scmp.eq.s32.totalorder %s17, 1
    %p75 = por %p73, %p74
    %p76 = scmp.ne.s32.totalorder %s65, %s66
    %p77 = scmp.eq.s32.totalorder %s17, 0
    %p78 = por %p76, %p77
    %p79 = scmp.ne.s32.totalorder %s65, %s66
    %p80 = scmp.eq.s32.totalorder %s18, 1
    %p81 = por %p79, %p80
    %p83 = scmp.ne.s32.totalorder %s66, %s82
    %p84 = scmp.eq.s32.totalorder %s18, 0
    %p85 = por %p83, %p84
    %s87 = sadd.s32 %s86, 1
    %p90 = scmp.eq.s32.totalorder %s12, 1
    %p91 = scmp.ne.s32.totalorder %s86, %s88
    %p92 = scmp.eq.s32.totalorder %s12, 0
    %p93 = por %p91, %p92
    %p94 = scmp.ne.s32.totalorder %s86, %s88
    %p95 = scmp.eq.s32.totalorder %s17, 1
    %p96 = por %p94, %p95
    %p97 = scmp.ne.s32.totalorder %s88, %s89
    %p98 = scmp.eq.s32.totalorder %s17, 0
    %p99 = por %p97, %p98
    %p100 = scmp.ne.s32.totalorder %s88, %s89
    %p101 = scmp.eq.s32.totalorder %s18, 1
    %p102 = por %p100, %p101
    %p104 = scmp.ne.s32.totalorder %s89, %s103
    %p105 = scmp.eq.s32.totalorder %s18, 0
    %p106 = por %p104, %p105
    %s108 = sadd.s32 %s107, 1
    %p111 = scmp.eq.s32.totalorder %s12, 1
    %p112 = scmp.ne.s32.totalorder %s107, %s109
    %p113 = scmp.eq.s32.totalorder %s12, 0
    %p114 = por %p112, %p113
    %p115 = scmp.ne.s32.totalorder %s107, %s109
    %p116 = scmp.eq.s32.totalorder %s17, 1
    %p117 = por %p115, %p116
    %p118 = scmp.ne.s32.totalorder %s109, %s110
    %p119 = scmp.eq.s32.totalorder %s17, 0
    %p120 = por %p118, %p119
    %p121 = scmp.ne.s32.totalorder %s109, %s110
    %p122 = scmp.eq.s32.totalorder %s18, 1
    %p123 = por %p121, %p122
    %p125 = scmp.ne.s32.totalorder %s110, %s124
    %p126 = scmp.eq.s32.totalorder %s18, 0
    %p127 = por %p125, %p126
    %s129 = sadd.s32 %s128, 1
    %p132 = scmp.eq.s32.totalorder %s12, 1
    %p133 = scmp.ne.s32.totalorder %s128, %s130
    %p134 = scmp.eq.s32.totalorder %s12, 0
    %p135 = por %p133, %p134
    %p136 = scmp.ne.s32.totalorder %s128, %s130
    %p137 = scmp.eq.s32.totalorder %s17, 1
    %p138 = por %p136, %p137
    %p139 = scmp.ne.s32.totalorder %s130, %s131
    %p140 = scmp.eq.s32.totalorder %s17, 0
    %p141 = por %p139, %p140
    %p142 = scmp.ne.s32.totalorder %s130, %s131
    %p143 = scmp.eq.s32.totalorder %s18, 1
    %p144 = por %p142, %p143
    %p146 = scmp.ne.s32.totalorder %s131, %s145
    %p147 = scmp.eq.s32.totalorder %s18, 0
    %p148 = por %p146, %p147
    %s150 = sadd.s32 %s149, 1
    %p153 = scmp.eq.s32.totalorder %s12, 1
    %p154 = scmp.ne.s32.totalorder %s149, %s151
    %p155 = scmp.eq.s32.totalorder %s12, 0
    %p156 = por %p154, %p155
    %p157 = scmp.ne.s32.totalorder %s149, %s151
    %p158 = scmp.eq.s32.totalorder %s17, 1
    %p159 = por %p157, %p158
    %p160 = scmp.ne.s32.totalorder %s151, %s152
    %p161 = scmp.eq.s32.totalorder %s17, 0
    %p162 = por %p160, %p161
    %p163 = scmp.ne.s32.totalorder %s151, %s152
    %p164 = scmp.eq.s32.totalorder %s18, 1
    %p165 = por %p163, %p164
    %p167 = scmp.ne.s32.totalorder %s152, %s166
    %p168 = scmp.eq.s32.totalorder %s18, 0
    %p169 = por %p167, %p168
    %s170 = ssub.s32 %s19, %s31
    %s171 = ssub.s32 %s20, %s27
    %s172 = sor.u32 %s170, %s171
    %p173 = scmp.eq.s32.totalorder %s172, 0
    %s175 = sadd.s32 %s174, 1
    %s176 = scalar_select %p173, %s174, %s175
    %p179 = pneg %p173
    %p180 = scmp.eq.s32.totalorder %s12, 1
    %p181 = por %p179, %p180
    %p182 = scmp.ne.s32.totalorder %s174, %s177
    %p183 = scmp.eq.s32.totalorder %s12, 0
    %p184 = por %p182, %p183
    %p185 = scmp.ne.s32.totalorder %s174, %s177
    %p186 = scmp.eq.s32.totalorder %s17, 1
    %p187 = por %p185, %p186
    %p188 = scmp.ne.s32.totalorder %s177, %s178
    %p189 = scmp.eq.s32.totalorder %s17, 0
    %p190 = por %p188, %p189
    %p191 = scmp.ne.s32.totalorder %s177, %s178
    %p192 = scmp.eq.s32.totalorder %s18, 1
    %p193 = por %p191, %p192
    %p195 = scmp.ne.s32.totalorder %s178, %s194
    %p196 = scmp.eq.s32.totalorder %s18, 0
    %p197 = por %p195, %p196
    %p198 = scmp.le.s32.totalorder 1, %s12
    %p199 = scmp.lt.s32.totalorder %s12, 3
    %p200 = pnand %p198, %p199
    %p201 = pneg %p200
    // Predicated region
    $region9: #{resb_forward.1} parent=5 // pred_check
      _
    $region10: #{resb_forward.1} parent=5 // pred_check_branch
      %203 = sbr.rel (%p200) target = $region12
    $region11: #{resb_forward.1} parent=5 // pred_region
      %s204 = ssub.s32 %s12, 1
      // Predicated region
      $region13: #{resb_forward.1} parent=11 // pred_check
        %p205 = pneg %p78
      $region14: #{resb_forward.1} parent=11 // pred_check_branch
        %207 = sbr.rel (%p205) target = $region16
      $region15: #{resb_forward.1} parent=11 // pred_region
        %p208 = scmp.lt.s32.totalorder %s22, 0
        %s209 = scalar_select %p208, %s22, 0
        %s210 = smul.addr %s209, 3
        %s211 = scalar_lea.vmem %s1, %s210
      $region16: #{resb_forward.1} parent=11 // pred_fallthru
        _
      // Predicated region
      $region17: #{resb_forward.1} parent=11 // pred_check
        %p212 = pneg %p99
      $region18: #{resb_forward.1} parent=11 // pred_check_branch
        %214 = sbr.rel (%p212) target = $region20
      $region19: #{resb_forward.1} parent=11 // pred_region
        _
      $region20: #{resb_forward.1} parent=11 // pred_fallthru
        _
      // Predicated region
      $region21: #{resb_forward.1} parent=11 // pred_check
        %p215 = pneg %p120
      $region22: #{resb_forward.1} parent=11 // pred_check_branch
        %217 = sbr.rel (%p215) target = $region24
      $region23: #{resb_forward.1} parent=11 // pred_region
        _
      $region24: #{resb_forward.1} parent=11 // pred_fallthru
        _
      // Predicated region
      $region25: #{resb_forward.1} parent=11 // pred_check
        %p218 = pneg %p141
      $region26: #{resb_forward.1} parent=11 // pred_check_branch
        %220 = sbr.rel (%p218) target = $region28
      $region27: #{resb_forward.1} parent=11 // pred_region
        _
      $region28: #{resb_forward.1} parent=11 // pred_fallthru
        _
      // Predicated region
      $region29: #{resb_forward.1} parent=11 // pred_check
        %p221 = pneg %p162
      $region30: #{resb_forward.1} parent=11 // pred_check_branch
        %223 = sbr.rel (%p221) target = $region32
      $region31: #{resb_forward.1} parent=11 // pred_region
        _
      $region32: #{resb_forward.1} parent=11 // pred_fallthru
        _
    $region12: #{resb_forward.1} parent=5 // pred_fallthru
      _
    %p224 = scmp.lt.s32.totalorder %s12, 2
    // Predicated region
    $region33: #{resb_forward.1} parent=5 // pred_check
      %p225 = pneg %p224
    $region34: #{resb_forward.1} parent=5 // pred_check_branch
      %227 = sbr.rel (%p225) target = $region36
    $region35: #{resb_forward.1} parent=5 // pred_region
      // Predicated region
      $region37: #{resb_forward.1} parent=35 // pred_check
        %p228 = pneg %p46
      $region38: #{resb_forward.1} parent=35 // pred_check_branch
        %230 = sbr.rel (%p228) target = $region40
      $region39: #{resb_forward.1} parent=35 // pred_region
        %p231 = scmp.lt.s32.totalorder %s19, 1
        %s232 = scalar_select %p231, %s19, 1
        %p233 = scmp.lt.s32.totalorder %s20, 0
        %s234 = scalar_select %p233, %s20, 0
        %s235 = smul.addr %s234, 4
        %s236 = smul.addr %s232, 4
        %s237 = sadd.s32 %s235, %s236
        %s238 = smul.addr %s237, 8
        %s239 = scalar_lea.vmem %s0, %s238
      $region40: #{resb_forward.1} parent=35 // pred_fallthru
        _
    $region36: #{resb_forward.1} parent=5 // pred_fallthru
      _
    %p240 = scmp.le.s32.totalorder 1, %s12
    %p241 = scmp.lt.s32.totalorder %s12, 3
    %p242 = pnand %p240, %p241
    %p243 = pneg %p242
    // Predicated region
    $region41: #{resb_forward.1} parent=5 // pred_check
      _
    $region42: #{resb_forward.1} parent=5 // pred_check_branch
      %245 = sbr.rel (%p242) target = $region44
    $region43: #{resb_forward.1} parent=5 // pred_region
      %s246 = ssub.s32 %s12, 1
      %p247 = scmp.lt.s32.totalorder %s21, 1
      %s248 = scalar_select %p247, %s21, 1
      %p249 = scmp.lt.s32.totalorder %s22, 0
      %s250 = scalar_select %p249, %s22, 0
      %s251 = smul.addr %s250, 4
      %s252 = smul.addr %s248, 4
      %s253 = sadd.s32 %s251, %s252
      %s254 = smul.addr %s253, 8
      %s255 = scalar_lea.vmem %s0, %s254
      %p256 = pneg %p52
      %p257 = pneg %p49
      %p258 = scmp.lt.s32.totalorder %s22, 0
      %s259 = scalar_select %p258, %s22, 0
      %s260 = smul.addr %s259, 3
      %s261 = scalar_lea.vmem %s1, %s260
      %p262 = pneg %p78
      %p263 = pneg %p75
      %p264 = pneg %p99
      %p265 = pneg %p96
      %p266 = pneg %p120
      %p267 = pneg %p117
      %p268 = pneg %p141
      %p269 = pneg %p138
      %p270 = pneg %p162
      %p271 = pneg %p159
      %p272 = pneg %p190
      %p273 = pneg %p187
      %p274 = scmp.lt.s32.totalorder %s21, 1
      %s275 = scalar_select %p274, %s21, 1
      %p276 = scmp.lt.s32.totalorder %s22, 0
      %s277 = scalar_select %p276, %s22, 0
      %s278 = smul.addr %s277, 3
      %s279 = smul.addr %s275, 3
      %s280 = sadd.s32 %s278, %s279
      %s281 = smul.addr %s280, 8
      %s282 = scalar_lea.vmem %s6, %s281
      %p283 = scmp.lt.s32.totalorder %s21, 1
      %s284 = scalar_select %p283, %s21, 1
      %p285 = scmp.lt.s32.totalorder %s22, 0
      %s286 = scalar_select %p285, %s22, 0
      %s287 = smul.addr %s286, 4
      %s288 = smul.addr %s284, 4
      %s289 = sadd.s32 %s287, %s288
      %s290 = smul.addr %s289, 8
      %s291 = scalar_lea.vmem %s0, %s290
      %p292 = scmp.lt.s32.totalorder %s22, 0
      %s293 = scalar_select %p292, %s22, 0
      %s294 = smul.addr %s293, 3
      %s295 = scalar_lea.vmem %s1, %s294
      %p296 = scmp.lt.s32.totalorder %s21, 1
      %s297 = scalar_select %p296, %s21, 1
      %p298 = scmp.lt.s32.totalorder %s22, 0
      %s299 = scalar_select %p298, %s22, 0
      %s300 = smul.addr %s299, 3
      %s301 = smul.addr %s297, 3
      %s302 = sadd.s32 %s300, %s301
      %s303 = smul.addr %s302, 8
      %s304 = scalar_lea.vmem %s6, %s303
      %v305 = vld [vmem:[%s291] sm:$0xff]
      %v306 = vld [vmem:[%s291 + $0x8] sm:$0xff]
      %v307 = vld [vmem:[%s291 + $0x10] sm:$0xff]
      %311 = vrot.lane.b32.xlu0 %v305, 127
      %v312 = vpop.permute.xlu0 %311
      %313 = vrot.lane.b32.xlu0 %v306, 127
      %v314 = vpop.permute.xlu0 %313
      %315 = vrot.lane.b32.xlu0 %v307, 127
      %v316 = vpop.permute.xlu0 %315
      %vm317 = vcmask 1039360
      %v318 = vsel %vm317, %v312, %v314
      %v319 = vsel %vm317, %v314, %v316
      %323 = vrot.lane.b32.xlu0 %v305, 126
      %v324 = vpop.permute.xlu0 %323
      %325 = vrot.lane.b32.xlu0 %v306, 126
      %v326 = vpop.permute.xlu0 %325
      %327 = vrot.lane.b32.xlu0 %v307, 126
      %v328 = vpop.permute.xlu0 %327
      %vm329 = vcmask 1031168
      %v330 = vsel %vm329, %v324, %v326
      %v331 = vsel %vm329, %v326, %v328
      %v335 = vld [vmem:[%s2] sm:$0xff]
      %s336 = scalar_lea.vmem %s2, 8
      %v337 = vld [vmem:[%s336] sm:$0xff]
      %338 = vrot.lane.b32.xlu0 %v305, 108
      %v339 = vpop.permute.xlu0 %338
      %340 = vrot.lane.b32.xlu0 %v306, 108
      %v341 = vpop.permute.xlu0 %340
      %342 = vrot.lane.b32.xlu0 %v307, 108
      %v343 = vpop.permute.xlu0 %342
      %344 = vrot.lane.b32.xlu0 %v318, 108
      %v345 = vpop.permute.xlu0 %344
      %346 = vrot.lane.b32.xlu0 %v319, 108
      %v347 = vpop.permute.xlu0 %346
      %348 = vrot.lane.b32.xlu0 %v316, 108
      %v349 = vpop.permute.xlu0 %348
      %350 = vrot.lane.b32.xlu0 %v330, 108
      %v351 = vpop.permute.xlu0 %350
      %352 = vrot.lane.b32.xlu0 %v331, 108
      %v353 = vpop.permute.xlu0 %352
      %354 = vrot.lane.b32.xlu0 %v328, 108
      %v355 = vpop.permute.xlu0 %354
      %vm356 = vcmask 883712
      %v357 = vsel %vm356, %v339, %v341
      %v358 = vsel %vm356, %v341, %v343
      %v359 = vsel %vm356, %v345, %v347
      %v360 = vsel %vm356, %v347, %v349
      %v361 = vsel %vm356, %v351, %v353
      %v362 = vsel %vm356, %v353, %v355
      %vm372 = vcmask 195584
      %v374 = vsel %vm372, %v337, 0
      %376 = vmatprep.subr.mxu0 %v358
      %377 = vmatpush1.msra.mxu0 %v357
      %378 = vmatprep.subr.mxu0 %v360
      %379 = vmatpush1.msra.mxu0 %v359
      %380 = vmatprep.subr.mxu0 %v362
      %381 = vmatpush1.msra.mxu0 %v361
      %382 = vmatprep.subr.mxu0 0.0
      %383 = vmatpush1.msra.mxu0 0.0
      %384 = vmatprep.subr.mxu0 0.0
      %385 = vmatpush1.msra.mxu0 0.0
      %386 = vmatprep.subr.mxu0 0.0
      %387 = vmatpush1.msra.mxu0 0.0
      %388 = vmatprep.subr.mxu0 0.0
      %389 = vmatpush1.msra.mxu0 0.0
      %390 = vmatprep.subr.mxu0 0.0
      %391 = vmatpush1.msra.mxu0 0.0
      %392 = vmatprep.subr.mxu0 0.0
      %393 = vmatpush1.msra.mxu0 0.0
      %394 = vmatprep.subr.mxu0 0.0
      %395 = vmatpush1.msra.mxu0 0.0
      %396 = vmatprep.subr.mxu0 0.0
      %397 = vmatpush1.msra.mxu0 0.0
      %398 = vmatprep.subr.mxu0 0.0
      %399 = vmatpush1.msra.mxu0 0.0
      %400 = vmatprep.subr.mxu0 0.0
      %401 = vmatpush1.msra.mxu0 0.0
      %402 = vmatprep.subr.mxu0 0.0
      %403 = vmatpush1.msra.mxu0 0.0
      %404 = vmatprep.subr.mxu0 0.0
      %405 = vmatpush1.msra.mxu0 0.0
      %406 = vmatprep.subr.mxu0 0.0
      %407 = vmatpush1.msra.mxu0 0.0
      %408 = vmatprep.subr.mxu0 0.0
      %409 = vmatpush1.msra.mxu0 0.0
      %410 = vmatprep.subr.mxu0 0.0
      %411 = vmatpush1.msra.mxu0 0.0
      %412 = vmatprep.subr.mxu0 0.0
      %413 = vmatpush1.msra.mxu0 0.0
      %414 = vmatprep.subr.mxu0 0.0
      %415 = vmatpush1.msra.mxu0 0.0
      %416 = vmatprep.subr.mxu0 0.0
      %417 = vmatpush1.msra.mxu0 0.0
      %418 = vmatprep.subr.mxu0 0.0
      %419 = vmatpush1.msra.mxu0 0.0
      %420 = vmatprep.subr.mxu0 0.0
      %421 = vmatpush1.msra.mxu0 0.0
      %422 = vmatprep.subr.mxu0 0.0
      %423 = vmatpush1.msra.mxu0 0.0
      %424 = vmatprep.subr.mxu0 0.0
      %425 = vmatpush1.msra.mxu0 0.0
      %426 = vmatprep.subr.mxu0 0.0
      %427 = vmatpush1.msra.mxu0 0.0
      %428 = vmatprep.subr.mxu0 0.0
      %429 = vmatpush1.msra.mxu0 0.0
      %430 = vmatprep.subr.mxu0 0.0
      %431 = vmatpush1.msra.mxu0 0.0
      %432 = vmatprep.subr.mxu0 0.0
      %433 = vmatpush1.msra.mxu0 0.0
      %434 = vmatprep.subr.mxu0 0.0
      %435 = vmatpush1.msra.mxu0 0.0
      %436 = vmatprep.subr.mxu0 0.0
      %437 = vmatpush1.msra.mxu0 0.0
      %438 = vmatprep.subr.mxu0 0.0
      %439 = vmatpush1.msra.mxu0 0.0
      %440 = vmatprep.mubr.f32.mxu0 0.0
      %441 = vmatmul.mubr.f32.gmra.mrb[0].mxu0 %v374
      %v442 = vpop.f32.mrb[0].mxu0
      %v443 = vadd.f32 0.0, %v442
      %v444 = vpop.f32.mrb[0].mxu0
      %v445 = vadd.f32 0.0, %v444
      %446 = vdwg.mxu0
      %447 = vmatprep.subr.mxu0 0.0
      %448 = vmatpush1.msra.mxu0 %v343
      %449 = vmatprep.subr.mxu0 0.0
      %450 = vmatpush1.msra.mxu0 %v349
      %451 = vmatprep.subr.mxu0 0.0
      %452 = vmatpush1.msra.mxu0 %v355
      %453 = vmatprep.subr.mxu0 0.0
      %454 = vmatpush1.msra.mxu0 0.0
      %455 = vmatprep.subr.mxu0 0.0
      %456 = vmatpush1.msra.mxu0 0.0
      %457 = vmatprep.subr.mxu0 0.0
      %458 = vmatpush1.msra.mxu0 0.0
      %459 = vmatprep.subr.mxu0 0.0
      %460 = vmatpush1.msra.mxu0 0.0
      %461 = vmatprep.subr.mxu0 0.0
      %462 = vmatpush1.msra.mxu0 0.0
      %463 = vmatprep.subr.mxu0 0.0
      %464 = vmatpush1.msra.mxu0 0.0
      %465 = vmatprep.subr.mxu0 0.0
      %466 = vmatpush1.msra.mxu0 0.0
      %467 = vmatprep.subr.mxu0 0.0
      %468 = vmatpush1.msra.mxu0 0.0
      %469 = vmatprep.subr.mxu0 0.0
      %470 = vmatpush1.msra.mxu0 0.0
      %471 = vmatprep.subr.mxu0 0.0
      %472 = vmatpush1.msra.mxu0 0.0
      %473 = vmatprep.subr.mxu0 0.0
      %474 = vmatpush1.msra.mxu0 0.0
      %475 = vmatprep.subr.mxu0 0.0
      %476 = vmatpush1.msra.mxu0 0.0
      %477 = vmatprep.subr.mxu0 0.0
      %478 = vmatpush1.msra.mxu0 0.0
      %479 = vmatprep.subr.mxu0 0.0
      %480 = vmatpush1.msra.mxu0 0.0
      %481 = vmatprep.subr.mxu0 0.0
      %482 = vmatpush1.msra.mxu0 0.0
      %483 = vmatprep.subr.mxu0 0.0
      %484 = vmatpush1.msra.mxu0 0.0
      %485 = vmatprep.subr.mxu0 0.0
      %486 = vmatpush1.msra.mxu0 0.0
      %487 = vmatprep.subr.mxu0 0.0
      %488 = vmatpush1.msra.mxu0 0.0
      %489 = vmatprep.subr.mxu0 0.0
      %490 = vmatpush1.msra.mxu0 0.0
      %491 = vmatprep.subr.mxu0 0.0
      %492 = vmatpush1.msra.mxu0 0.0
      %493 = vmatprep.subr.mxu0 0.0
      %494 = vmatpush1.msra.mxu0 0.0
      %495 = vmatprep.subr.mxu0 0.0
      %496 = vmatpush1.msra.mxu0 0.0
      %497 = vmatprep.subr.mxu0 0.0
      %498 = vmatpush1.msra.mxu0 0.0
      %499 = vmatprep.subr.mxu0 0.0
      %500 = vmatpush1.msra.mxu0 0.0
      %501 = vmatprep.subr.mxu0 0.0
      %502 = vmatpush1.msra.mxu0 0.0
      %503 = vmatprep.subr.mxu0 0.0
      %504 = vmatpush1.msra.mxu0 0.0
      %505 = vmatprep.subr.mxu0 0.0
      %506 = vmatpush1.msra.mxu0 0.0
      %507 = vmatprep.subr.mxu0 0.0
      %508 = vmatpush1.msra.mxu0 0.0
      %509 = vmatprep.subr.mxu0 0.0
      %510 = vmatpush1.msra.mxu0 0.0
      %511 = vmatprep.mubr.f32.mxu0 0.0
      %512 = vmatmul.mubr.f32.gmra.mrb[0].mxu0 %v374
      %v513 = vpop.f32.mrb[0].mxu0
      %v514 = vadd.f32 0.0, %v513
      %v515 = vpop.f32.mrb[0].mxu0
      %516 = vdwg.mxu0
      %v518 = vsel %vm372, %v335, 0
      %520 = vmatprep.subr.mxu0 %v306
      %521 = vmatpush1.msra.mxu0 %v305
      %522 = vmatprep.subr.mxu0 %v319
      %523 = vmatpush1.msra.mxu0 %v318
      %524 = vmatprep.subr.mxu0 %v331
      %525 = vmatpush1.msra.mxu0 %v330
      %526 = vmatprep.subr.mxu0 0.0
      %527 = vmatpush1.msra.mxu0 0.0
      %528 = vmatprep.subr.mxu0 0.0
      %529 = vmatpush1.msra.mxu0 0.0
      %530 = vmatprep.subr.mxu0 0.0
      %531 = vmatpush1.msra.mxu0 0.0
      %532 = vmatprep.subr.mxu0 0.0
      %533 = vmatpush1.msra.mxu0 0.0
      %534 = vmatprep.subr.mxu0 0.0
      %535 = vmatpush1.msra.mxu0 0.0
      %536 = vmatprep.subr.mxu0 0.0
      %537 = vmatpush1.msra.mxu0 0.0
      %538 = vmatprep.subr.mxu0 0.0
      %539 = vmatpush1.msra.mxu0 0.0
      %540 = vmatprep.subr.mxu0 0.0
      %541 = vmatpush1.msra.mxu0 0.0
      %542 = vmatprep.subr.mxu0 0.0
      %543 = vmatpush1.msra.mxu0 0.0
      %544 = vmatprep.subr.mxu0 0.0
      %545 = vmatpush1.msra.mxu0 0.0
      %546 = vmatprep.subr.mxu0 0.0
      %547 = vmatpush1.msra.mxu0 0.0
      %548 = vmatprep.subr.mxu0 0.0
      %549 = vmatpush1.msra.mxu0 0.0
      %550 = vmatprep.subr.mxu0 0.0
      %551 = vmatpush1.msra.mxu0 0.0
      %552 = vmatprep.subr.mxu0 0.0
      %553 = vmatpush1.msra.mxu0 0.0
      %554 = vmatprep.subr.mxu0 0.0
      %555 = vmatpush1.msra.mxu0 0.0
      %556 = vmatprep.subr.mxu0 0.0
      %557 = vmatpush1.msra.mxu0 0.0
      %558 = vmatprep.subr.mxu0 0.0
      %559 = vmatpush1.msra.mxu0 0.0
      %560 = vmatprep.subr.mxu0 0.0
      %561 = vmatpush1.msra.mxu0 0.0
      %562 = vmatprep.subr.mxu0 0.0
      %563 = vmatpush1.msra.mxu0 0.0
      %564 = vmatprep.subr.mxu0 0.0
      %565 = vmatpush1.msra.mxu0 0.0
      %566 = vmatprep.subr.mxu0 0.0
      %567 = vmatpush1.msra.mxu0 0.0
      %568 = vmatprep.subr.mxu0 0.0
      %569 = vmatpush1.msra.mxu0 0.0
      %570 = vmatprep.subr.mxu0 0.0
      %571 = vmatpush1.msra.mxu0 0.0
      %572 = vmatprep.subr.mxu0 0.0
      %573 = vmatpush1.msra.mxu0 0.0
      %574 = vmatprep.subr.mxu0 0.0
      %575 = vmatpush1.msra.mxu0 0.0
      %576 = vmatprep.subr.mxu0 0.0
      %577 = vmatpush1.msra.mxu0 0.0
      %578 = vmatprep.subr.mxu0 0.0
      %579 = vmatpush1.msra.mxu0 0.0
      %580 = vmatprep.subr.mxu0 0.0
      %581 = vmatpush1.msra.mxu0 0.0
      %582 = vmatprep.subr.mxu0 0.0
      %583 = vmatpush1.msra.mxu0 0.0
      %584 = vmatprep.mubr.f32.mxu0 0.0
      %585 = vmatmul.mubr.f32.gmra.mrb[0].mxu0 %v518
      %v586 = vpop.f32.mrb[0].mxu0
      %v587 = vadd.f32 %v443, %v586
      %v588 = vpop.f32.mrb[0].mxu0
      %v589 = vadd.f32 %v445, %v588
      %590 = vdwg.mxu0
      %591 = vmatprep.subr.mxu0 0.0
      %592 = vmatpush1.msra.mxu0 %v307
      %593 = vmatprep.subr.mxu0 0.0
      %594 = vmatpush1.msra.mxu0 %v316
      %595 = vmatprep.subr.mxu0 0.0
      %596 = vmatpush1.msra.mxu0 %v328
      %597 = vmatprep.subr.mxu0 0.0
      %598 = vmatpush1.msra.mxu0 0.0
      %599 = vmatprep.subr.mxu0 0.0
      %600 = vmatpush1.msra.mxu0 0.0
      %601 = vmatprep.subr.mxu0 0.0
      %602 = vmatpush1.msra.mxu0 0.0
      %603 = vmatprep.subr.mxu0 0.0
      %604 = vmatpush1.msra.mxu0 0.0
      %605 = vmatprep.subr.mxu0 0.0
      %606 = vmatpush1.msra.mxu0 0.0
      %607 = vmatprep.subr.mxu0 0.0
      %608 = vmatpush1.msra.mxu0 0.0
      %609 = vmatprep.subr.mxu0 0.0
      %610 = vmatpush1.msra.mxu0 0.0
      %611 = vmatprep.subr.mxu0 0.0
      %612 = vmatpush1.msra.mxu0 0.0
      %613 = vmatprep.subr.mxu0 0.0
      %614 = vmatpush1.msra.mxu0 0.0
      %615 = vmatprep.subr.mxu0 0.0
      %616 = vmatpush1.msra.mxu0 0.0
      %617 = vmatprep.subr.mxu0 0.0
      %618 = vmatpush1.msra.mxu0 0.0
      %619 = vmatprep.subr.mxu0 0.0
      %620 = vmatpush1.msra.mxu0 0.0
      %621 = vmatprep.subr.mxu0 0.0
      %622 = vmatpush1.msra.mxu0 0.0
      %623 = vmatprep.subr.mxu0 0.0
      %624 = vmatpush1.msra.mxu0 0.0
      %625 = vmatprep.subr.mxu0 0.0
      %626 = vmatpush1.msra.mxu0 0.0
      %627 = vmatprep.subr.mxu0 0.0
      %628 = vmatpush1.msra.mxu0 0.0
      %629 = vmatprep.subr.mxu0 0.0
      %630 = vmatpush1.msra.mxu0 0.0
      %631 = vmatprep.subr.mxu0 0.0
      %632 = vmatpush1.msra.mxu0 0.0
      %633 = vmatprep.subr.mxu0 0.0
      %634 = vmatpush1.msra.mxu0 0.0
      %635 = vmatprep.subr.mxu0 0.0
      %636 = vmatpush1.msra.mxu0 0.0
      %637 = vmatprep.subr.mxu0 0.0
      %638 = vmatpush1.msra.mxu0 0.0
      %639 = vmatprep.subr.mxu0 0.0
      %640 = vmatpush1.msra.mxu0 0.0
      %641 = vmatprep.subr.mxu0 0.0
      %642 = vmatpush1.msra.mxu0 0.0
      %643 = vmatprep.subr.mxu0 0.0
      %644 = vmatpush1.msra.mxu0 0.0
      %645 = vmatprep.subr.mxu0 0.0
      %646 = vmatpush1.msra.mxu0 0.0
      %647 = vmatprep.subr.mxu0 0.0
      %648 = vmatpush1.msra.mxu0 0.0
      %649 = vmatprep.subr.mxu0 0.0
      %650 = vmatpush1.msra.mxu0 0.0
      %651 = vmatprep.subr.mxu0 0.0
      %652 = vmatpush1.msra.mxu0 0.0
      %653 = vmatprep.subr.mxu0 0.0
      %654 = vmatpush1.msra.mxu0 0.0
      %655 = vmatprep.mubr.f32.mxu0 0.0
      %656 = vmatmul.mubr.f32.gmra.mrb[0].mxu0 %v518
      %v657 = vpop.f32.mrb[0].mxu0
      %v658 = vadd.f32 %v514, %v657
      %v659 = vpop.f32.mrb[0].mxu0
      %660 = vdwg.mxu0
      %v661 = vld [vmem:[%s291] sm:$0xff]
      %v662 = vld [vmem:[%s291 + $0x8] sm:$0xff]
      %v663 = vld [vmem:[%s291 + $0x10] sm:$0xff]
      %v664 = vld [vmem:[%s291 + $0x18] sm:$0xff]
      %669 = vrot.lane.b32.xlu0 %v661, 127
      %v670 = vpop.permute.xlu0 %669
      %671 = vrot.lane.b32.xlu0 %v662, 127
      %v672 = vpop.permute.xlu0 %671
      %673 = vrot.lane.b32.xlu0 %v663, 127
      %v674 = vpop.permute.xlu0 %673
      %675 = vrot.lane.b32.xlu0 %v664, 127
      %v676 = vpop.permute.xlu0 %675
      %v677 = vsel %vm317, %v670, %v672
      %v678 = vsel %vm317, %v672, %v674
      %v679 = vsel %vm317, %v674, %v676
      %680 = vrot.lane.b32.xlu0 %v661, 126
      %v681 = vpop.permute.xlu0 %680
      %682 = vrot.lane.b32.xlu0 %v662, 126
      %v683 = vpop.permute.xlu0 %682
      %684 = vrot.lane.b32.xlu0 %v663, 126
      %v685 = vpop.permute.xlu0 %684
      %686 = vrot.lane.b32.xlu0 %v664, 126
      %v687 = vpop.permute.xlu0 %686
      %v688 = vsel %vm329, %v681, %v683
      %v689 = vsel %vm329, %v683, %v685
      %v690 = vsel %vm329, %v685, %v687
      %s691 = scalar_lea.vmem %s2, 16
      %v692 = vld [vmem:[%s691] sm:$0xff]
      %693 = vrot.lane.b32.xlu0 %v661, 88
      %v694 = vpop.permute.xlu0 %693
      %695 = vrot.lane.b32.xlu0 %v662, 88
      %v696 = vpop.permute.xlu0 %695
      %697 = vrot.lane.b32.xlu0 %v663, 88
      %v698 = vpop.permute.xlu0 %697
      %699 = vrot.lane.b32.xlu0 %v664, 88
      %v700 = vpop.permute.xlu0 %699
      %701 = vrot.lane.b32.xlu0 %v677, 88
      %v702 = vpop.permute.xlu0 %701
      %703 = vrot.lane.b32.xlu0 %v678, 88
      %v704 = vpop.permute.xlu0 %703
      %705 = vrot.lane.b32.xlu0 %v679, 88
      %v706 = vpop.permute.xlu0 %705
      %707 = vrot.lane.b32.xlu0 %v676, 88
      %v708 = vpop.permute.xlu0 %707
      %709 = vrot.lane.b32.xlu0 %v688, 88
      %v710 = vpop.permute.xlu0 %709
      %711 = vrot.lane.b32.xlu0 %v689, 88
      %v712 = vpop.permute.xlu0 %711
      %713 = vrot.lane.b32.xlu0 %v690, 88
      %v714 = vpop.permute.xlu0 %713
      %715 = vrot.lane.b32.xlu0 %v687, 88
      %v716 = vpop.permute.xlu0 %715
      %vm717 = vcmask 719872
      %v718 = vsel %vm717, %v694, %v696
      %v719 = vsel %vm717, %v696, %v698
      %v720 = vsel %vm717, %v698, %v700
      %v721 = vsel %vm717, %v702, %v704
      %v722 = vsel %vm717, %v704, %v706
      %v723 = vsel %vm717, %v706, %v708
      %v724 = vsel %vm717, %v710, %v712
      %v725 = vsel %vm717, %v712, %v714
      %v726 = vsel %vm717, %v714, %v716
      %v737 = vsel %vm372, %v692, 0
      %739 = vmatprep.subr.mxu0 %v719
      %740 = vmatpush1.msra.mxu0 %v718
      %741 = vmatprep.subr.mxu0 %v722
      %742 = vmatpush1.msra.mxu0 %v721
      %743 = vmatprep.subr.mxu0 %v725
      %744 = vmatpush1.msra.mxu0 %v724
      %745 = vmatprep.subr.mxu0 0.0
      %746 = vmatpush1.msra.mxu0 0.0
      %747 = vmatprep.subr.mxu0 0.0
      %748 = vmatpush1.msra.mxu0 0.0
      %749 = vmatprep.subr.mxu0 0.0
      %750 = vmatpush1.msra.mxu0 0.0
      %751 = vmatprep.subr.mxu0 0.0
      %752 = vmatpush1.msra.mxu0 0.0
      %753 = vmatprep.subr.mxu0 0.0
      %754 = vmatpush1.msra.mxu0 0.0
      %755 = vmatprep.subr.mxu0 0.0
      %756 = vmatpush1.msra.mxu0 0.0
      %757 = vmatprep.subr.mxu0 0.0
      %758 = vmatpush1.msra.mxu0 0.0
      %759 = vmatprep.subr.mxu0 0.0
      %760 = vmatpush1.msra.mxu0 0.0
      %761 = vmatprep.subr.mxu0 0.0
      %762 = vmatpush1.msra.mxu0 0.0
      %763 = vmatprep.subr.mxu0 0.0
      %764 = vmatpush1.msra.mxu0 0.0
      %765 = vmatprep.subr.mxu0 0.0
      %766 = vmatpush1.msra.mxu0 0.0
      %767 = vmatprep.subr.mxu0 0.0
      %768 = vmatpush1.msra.mxu0 0.0
      %769 = vmatprep.subr.mxu0 0.0
      %770 = vmatpush1.msra.mxu0 0.0
      %771 = vmatprep.subr.mxu0 0.0
      %772 = vmatpush1.msra.mxu0 0.0
      %773 = vmatprep.subr.mxu0 0.0
      %774 = vmatpush1.msra.mxu0 0.0
      %775 = vmatprep.subr.mxu0 0.0
      %776 = vmatpush1.msra.mxu0 0.0
      %777 = vmatprep.subr.mxu0 0.0
      %778 = vmatpush1.msra.mxu0 0.0
      %779 = vmatprep.subr.mxu0 0.0
      %780 = vmatpush1.msra.mxu0 0.0
      %781 = vmatprep.subr.mxu0 0.0
      %782 = vmatpush1.msra.mxu0 0.0
      %783 = vmatprep.subr.mxu0 0.0
      %784 = vmatpush1.msra.mxu0 0.0
      %785 = vmatprep.subr.mxu0 0.0
      %786 = vmatpush1.msra.mxu0 0.0
      %787 = vmatprep.subr.mxu0 0.0
      %788 = vmatpush1.msra.mxu0 0.0
      %789 = vmatprep.subr.mxu0 0.0
      %790 = vmatpush1.msra.mxu0 0.0
      %791 = vmatprep.subr.mxu0 0.0
      %792 = vmatpush1.msra.mxu0 0.0
      %793 = vmatprep.subr.mxu0 0.0
      %794 = vmatpush1.msra.mxu0 0.0
      %795 = vmatprep.subr.mxu0 0.0
      %796 = vmatpush1.msra.mxu0 0.0
      %797 = vmatprep.subr.mxu0 0.0
      %798 = vmatpush1.msra.mxu0 0.0
      %799 = vmatprep.subr.mxu0 0.0
      %800 = vmatpush1.msra.mxu0 0.0
      %801 = vmatprep.subr.mxu0 0.0
      %802 = vmatpush1.msra.mxu0 0.0
      %803 = vmatprep.mubr.f32.mxu0 0.0
      %804 = vmatmul.mubr.f32.gmra.mrb[0].mxu0 %v737
      %v805 = vpop.f32.mrb[0].mxu0
      %v806 = vadd.f32 0.0, %v805
      %v807 = vpop.f32.mrb[0].mxu0
      %v808 = vadd.f32 0.0, %v807
      %809 = vdwg.mxu0
      %810 = vmatprep.subr.mxu0 0.0
      %811 = vmatpush1.msra.mxu0 %v720
      %812 = vmatprep.subr.mxu0 0.0
      %813 = vmatpush1.msra.mxu0 %v723
      %814 = vmatprep.subr.mxu0 0.0
      %815 = vmatpush1.msra.mxu0 %v726
      %816 = vmatprep.subr.mxu0 0.0
      %817 = vmatpush1.msra.mxu0 0.0
      %818 = vmatprep.subr.mxu0 0.0
      %819 = vmatpush1.msra.mxu0 0.0
      %820 = vmatprep.subr.mxu0 0.0
      %821 = vmatpush1.msra.mxu0 0.0
      %822 = vmatprep.subr.mxu0 0.0
      %823 = vmatpush1.msra.mxu0 0.0
      %824 = vmatprep.subr.mxu0 0.0
      %825 = vmatpush1.msra.mxu0 0.0
      %826 = vmatprep.subr.mxu0 0.0
      %827 = vmatpush1.msra.mxu0 0.0
      %828 = vmatprep.subr.mxu0 0.0
      %829 = vmatpush1.msra.mxu0 0.0
      %830 = vmatprep.subr.mxu0 0.0
      %831 = vmatpush1.msra.mxu0 0.0
      %832 = vmatprep.subr.mxu0 0.0
      %833 = vmatpush1.msra.mxu0 0.0
      %834 = vmatprep.subr.mxu0 0.0
      %835 = vmatpush1.msra.mxu0 0.0
      %836 = vmatprep.subr.mxu0 0.0
      %837 = vmatpush1.msra.mxu0 0.0
      %838 = vmatprep.subr.mxu0 0.0
      %839 = vmatpush1.msra.mxu0 0.0
      %840 = vmatprep.subr.mxu0 0.0
      %841 = vmatpush1.msra.mxu0 0.0
      %842 = vmatprep.subr.mxu0 0.0
      %843 = vmatpush1.msra.mxu0 0.0
      %844 = vmatprep.subr.mxu0 0.0
      %845 = vmatpush1.msra.mxu0 0.0
      %846 = vmatprep.subr.mxu0 0.0
      %847 = vmatpush1.msra.mxu0 0.0
      %848 = vmatprep.subr.mxu0 0.0
      %849 = vmatpush1.msra.mxu0 0.0
      %850 = vmatprep.subr.mxu0 0.0
      %851 = vmatpush1.msra.mxu0 0.0
      %852 = vmatprep.subr.mxu0 0.0
      %853 = vmatpush1.msra.mxu0 0.0
      %854 = vmatprep.subr.mxu0 0.0
      %855 = vmatpush1.msra.mxu0 0.0
      %856 = vmatprep.subr.mxu0 0.0
      %857 = vmatpush1.msra.mxu0 0.0
      %858 = vmatprep.subr.mxu0 0.0
      %859 = vmatpush1.msra.mxu0 0.0
      %860 = vmatprep.subr.mxu0 0.0
      %861 = vmatpush1.msra.mxu0 0.0
      %862 = vmatprep.subr.mxu0 0.0
      %863 = vmatpush1.msra.mxu0 0.0
      %864 = vmatprep.subr.mxu0 0.0
      %865 = vmatpush1.msra.mxu0 0.0
      %866 = vmatprep.subr.mxu0 0.0
      %867 = vmatpush1.msra.mxu0 0.0
      %868 = vmatprep.subr.mxu0 0.0
      %869 = vmatpush1.msra.mxu0 0.0
      %870 = vmatprep.subr.mxu0 0.0
      %871 = vmatpush1.msra.mxu0 0.0
      %872 = vmatprep.subr.mxu0 0.0
      %873 = vmatpush1.msra.mxu0 0.0
      %874 = vmatprep.mubr.f32.mxu0 0.0
      %875 = vmatmul.mubr.f32.gmra.mrb[0].mxu0 %v737
      %v876 = vpop.f32.mrb[0].mxu0
      %v877 = vadd.f32 0.0, %v876
      %v878 = vpop.f32.mrb[0].mxu0
      %879 = vdwg.mxu0
      %v880 = vadd.f32 %v587, %v806
      %v881 = vadd.f32 %v589, %v808
      %v882 = vadd.f32 %v658, %v877
      %v883 = vld [vmem:[%s3] sm:$0xff]
      %885 = vset.pattern.permute.xlu0 0
      %886 = vperm.xlu0 %885, %v883
      %v887 = vpop.permute.xlu0 %886
      %v889 = vadd.f32 %v880, %v887
      %v890 = vadd.f32 %v881, %v887
      %v891 = vadd.f32 %v882, %v887
      %v892 = vmul.f32 %v889, 0.1
      %v893 = vmul.f32 %v890, 0.1
      %v894 = vmul.f32 %v891, 0.1
      %v895 = vmax.f32 %v889, %v892
      %v896 = vmax.f32 %v890, %v893
      %v897 = vmax.f32 %v891, %v894
      %v898 = vld [vmem:[%s295] sm:$0x7]
      %v900 = vlaneseq
      %v901 = vshrl.u32 %v900, 7
      %v902 = vsub.s32 0, %v901
      %v903 = vrot.slane %v898, %v902
      %v904 = vlaneseq
      %v905 = vshrl.u32 %v904, 7
      %v906 = vsub.s32 1, %v905
      %v907 = vrot.slane %v898, %v906
      %v908 = vlaneseq
      %v909 = vshrl.u32 %v908, 7
      %v910 = vsub.s32 2, %v909
      %v911 = vrot.slane %v898, %v910
      %v915 = vmul.f32 %v895, %v903
      %v916 = vmul.f32 %v896, %v907
      %v917 = vmul.f32 %v897, %v911
      %918 = vst [vmem:[#allocation2] sm:$0xff] %v915
      %919 = vst [vmem:[#allocation2 + $0x8] sm:$0xff] %v916
      %vm920 = vcmask 834560
      %921 = vst.msk [vmem:[#allocation2 + $0x10] sm:$0xff] %vm920, %v917
      %v922 = vld [vmem:[#allocation2] sm:$0xff]
      %v923 = vld [vmem:[#allocation2 + $0x8] sm:$0xff]
      %v924 = vld [vmem:[#allocation2 + $0x10] sm:$0xff]
      %928 = vrot.lane.b32.xlu0 %v922, 127
      %v929 = vpop.permute.xlu0 %928
      %930 = vrot.lane.b32.xlu0 %v923, 127
      %v931 = vpop.permute.xlu0 %930
      %932 = vrot.lane.b32.xlu0 %v924, 127
      %v933 = vpop.permute.xlu0 %932
      %v934 = vsel %vm317, %v929, %v931
      %v935 = vsel %vm317, %v931, %v933
      %939 = vrot.lane.b32.xlu0 %v922, 126
      %v940 = vpop.permute.xlu0 %939
      %941 = vrot.lane.b32.xlu0 %v923, 126
      %v942 = vpop.permute.xlu0 %941
      %943 = vrot.lane.b32.xlu0 %v924, 126
      %v944 = vpop.permute.xlu0 %943
      %v945 = vsel %vm329, %v940, %v942
      %v946 = vsel %vm329, %v942, %v944
      %v950 = vld [vmem:[%s4] sm:$0xff]
      %s951 = scalar_lea.vmem %s4, 8
      %v952 = vld [vmem:[%s951] sm:$0xff]
      %953 = vrot.lane.b32.xlu0 %v922, 108
      %v954 = vpop.permute.xlu0 %953
      %955 = vrot.lane.b32.xlu0 %v923, 108
      %v956 = vpop.permute.xlu0 %955
      %957 = vrot.lane.b32.xlu0 %v924, 108
      %v958 = vpop.permute.xlu0 %957
      %959 = vrot.lane.b32.xlu0 %v934, 108
      %v960 = vpop.permute.xlu0 %959
      %961 = vrot.lane.b32.xlu0 %v935, 108
      %v962 = vpop.permute.xlu0 %961
      %963 = vrot.lane.b32.xlu0 %v933, 108
      %v964 = vpop.permute.xlu0 %963
      %965 = vrot.lane.b32.xlu0 %v945, 108
      %v966 = vpop.permute.xlu0 %965
      %967 = vrot.lane.b32.xlu0 %v946, 108
      %v968 = vpop.permute.xlu0 %967
      %969 = vrot.lane.b32.xlu0 %v944, 108
      %v970 = vpop.permute.xlu0 %969
      %v971 = vsel %vm356, %v954, %v956
      %v972 = vsel %vm356, %v956, %v958
      %v973 = vsel %vm356, %v960, %v962
      %v974 = vsel %vm356, %v962, %v964
      %v975 = vsel %vm356, %v966, %v968
      %v976 = vsel %vm356, %v968, %v970
      %v987 = vsel %vm372, %v952, 0
      %989 = vmatprep.subr.mxu0 %v972
      %990 = vmatpush1.msra.mxu0 %v971
      %991 = vmatprep.subr.mxu0 %v974
      %992 = vmatpush1.msra.mxu0 %v973
      %993 = vmatprep.subr.mxu0 %v976
      %994 = vmatpush1.msra.mxu0 %v975
      %995 = vmatprep.subr.mxu0 0.0
      %996 = vmatpush1.msra.mxu0 0.0
      %997 = vmatprep.subr.mxu0 0.0
      %998 = vmatpush1.msra.mxu0 0.0
      %999 = vmatprep.subr.mxu0 0.0
      %1000 = vmatpush1.msra.mxu0 0.0
      %1001 = vmatprep.subr.mxu0 0.0
      %1002 = vmatpush1.msra.mxu0 0.0
      %1003 = vmatprep.subr.mxu0 0.0
      %1004 = vmatpush1.msra.mxu0 0.0
      %1005 = vmatprep.subr.mxu0 0.0
      %1006 = vmatpush1.msra.mxu0 0.0
      %1007 = vmatprep.subr.mxu0 0.0
      %1008 = vmatpush1.msra.mxu0 0.0
      %1009 = vmatprep.subr.mxu0 0.0
      %1010 = vmatpush1.msra.mxu0 0.0
      %1011 = vmatprep.subr.mxu0 0.0
      %1012 = vmatpush1.msra.mxu0 0.0
      %1013 = vmatprep.subr.mxu0 0.0
      %1014 = vmatpush1.msra.mxu0 0.0
      %1015 = vmatprep.subr.mxu0 0.0
      %1016 = vmatpush1.msra.mxu0 0.0
      %1017 = vmatprep.subr.mxu0 0.0
      %1018 = vmatpush1.msra.mxu0 0.0
      %1019 = vmatprep.subr.mxu0 0.0
      %1020 = vmatpush1.msra.mxu0 0.0
      %1021 = vmatprep.subr.mxu0 0.0
      %1022 = vmatpush1.msra.mxu0 0.0
      %1023 = vmatprep.subr.mxu0 0.0
      %1024 = vmatpush1.msra.mxu0 0.0
      %1025 = vmatprep.subr.mxu0 0.0
      %1026 = vmatpush1.msra.mxu0 0.0
      %1027 = vmatprep.subr.mxu0 0.0
      %1028 = vmatpush1.msra.mxu0 0.0
      %1029 = vmatprep.subr.mxu0 0.0
      %1030 = vmatpush1.msra.mxu0 0.0
      %1031 = vmatprep.subr.mxu0 0.0
      %1032 = vmatpush1.msra.mxu0 0.0
      %1033 = vmatprep.subr.mxu0 0.0
      %1034 = vmatpush1.msra.mxu0 0.0
      %1035 = vmatprep.subr.mxu0 0.0
      %1036 = vmatpush1.msra.mxu0 0.0
      %1037 = vmatprep.subr.mxu0 0.0
      %1038 = vmatpush1.msra.mxu0 0.0
      %1039 = vmatprep.subr.mxu0 0.0
      %1040 = vmatpush1.msra.mxu0 0.0
      %1041 = vmatprep.subr.mxu0 0.0
      %1042 = vmatpush1.msra.mxu0 0.0
      %1043 = vmatprep.subr.mxu0 0.0
      %1044 = vmatpush1.msra.mxu0 0.0
      %1045 = vmatprep.subr.mxu0 0.0
      %1046 = vmatpush1.msra.mxu0 0.0
      %1047 = vmatprep.subr.mxu0 0.0
      %1048 = vmatpush1.msra.mxu0 0.0
      %1049 = vmatprep.subr.mxu0 0.0
      %1050 = vmatpush1.msra.mxu0 0.0
      %1051 = vmatprep.subr.mxu0 0.0
      %1052 = vmatpush1.msra.mxu0 0.0
      %1053 = vmatprep.mubr.f32.mxu0 0.0
      %1054 = vmatmul.mubr.f32.gmra.mrb[0].mxu0 %v987
      %v1055 = vpop.f32.mrb[0].mxu0
      %v1056 = vadd.f32 0.0, %v1055
      %v1057 = vpop.f32.mrb[0].mxu0
      %v1058 = vadd.f32 0.0, %v1057
      %1059 = vdwg.mxu0
      %1060 = vmatprep.subr.mxu0 0.0
      %1061 = vmatpush1.msra.mxu0 %v958
      %1062 = vmatprep.subr.mxu0 0.0
      %1063 = vmatpush1.msra.mxu0 %v964
      %1064 = vmatprep.subr.mxu0 0.0
      %1065 = vmatpush1.msra.mxu0 %v970
      %1066 = vmatprep.subr.mxu0 0.0
      %1067 = vmatpush1.msra.mxu0 0.0
      %1068 = vmatprep.subr.mxu0 0.0
      %1069 = vmatpush1.msra.mxu0 0.0
      %1070 = vmatprep.subr.mxu0 0.0
      %1071 = vmatpush1.msra.mxu0 0.0
      %1072 = vmatprep.subr.mxu0 0.0
      %1073 = vmatpush1.msra.mxu0 0.0
      %1074 = vmatprep.subr.mxu0 0.0
      %1075 = vmatpush1.msra.mxu0 0.0
      %1076 = vmatprep.subr.mxu0 0.0
      %1077 = vmatpush1.msra.mxu0 0.0
      %1078 = vmatprep.subr.mxu0 0.0
      %1079 = vmatpush1.msra.mxu0 0.0
      %1080 = vmatprep.subr.mxu0 0.0
      %1081 = vmatpush1.msra.mxu0 0.0
      %1082 = vmatprep.subr.mxu0 0.0
      %1083 = vmatpush1.msra.mxu0 0.0
      %1084 = vmatprep.subr.mxu0 0.0
      %1085 = vmatpush1.msra.mxu0 0.0
      %1086 = vmatprep.subr.mxu0 0.0
      %1087 = vmatpush1.msra.mxu0 0.0
      %1088 = vmatprep.subr.mxu0 0.0
      %1089 = vmatpush1.msra.mxu0 0.0
      %1090 = vmatprep.subr.mxu0 0.0
      %1091 = vmatpush1.msra.mxu0 0.0
      %1092 = vmatprep.subr.mxu0 0.0
      %1093 = vmatpush1.msra.mxu0 0.0
      %1094 = vmatprep.subr.mxu0 0.0
      %1095 = vmatpush1.msra.mxu0 0.0
      %1096 = vmatprep.subr.mxu0 0.0
      %1097 = vmatpush1.msra.mxu0 0.0
      %1098 = vmatprep.subr.mxu0 0.0
      %1099 = vmatpush1.msra.mxu0 0.0
      %1100 = vmatprep.subr.mxu0 0.0
      %1101 = vmatpush1.msra.mxu0 0.0
      %1102 = vmatprep.subr.mxu0 0.0
      %1103 = vmatpush1.msra.mxu0 0.0
      %1104 = vmatprep.subr.mxu0 0.0
      %1105 = vmatpush1.msra.mxu0 0.0
      %1106 = vmatprep.subr.mxu0 0.0
      %1107 = vmatpush1.msra.mxu0 0.0
      %1108 = vmatprep.subr.mxu0 0.0
      %1109 = vmatpush1.msra.mxu0 0.0
      %1110 = vmatprep.subr.mxu0 0.0
      %1111 = vmatpush1.msra.mxu0 0.0
      %1112 = vmatprep.subr.mxu0 0.0
      %1113 = vmatpush1.msra.mxu0 0.0
      %1114 = vmatprep.subr.mxu0 0.0
      %1115 = vmatpush1.msra.mxu0 0.0
      %1116 = vmatprep.subr.mxu0 0.0
      %1117 = vmatpush1.msra.mxu0 0.0
      %1118 = vmatprep.subr.mxu0 0.0
      %1119 = vmatpush1.msra.mxu0 0.0
      %1120 = vmatprep.subr.mxu0 0.0
      %1121 = vmatpush1.msra.mxu0 0.0
      %1122 = vmatprep.subr.mxu0 0.0
      %1123 = vmatpush1.msra.mxu0 0.0
      %1124 = vmatprep.mubr.f32.mxu0 0.0
      %1125 = vmatmul.mubr.f32.gmra.mrb[0].mxu0 %v987
      %v1126 = vpop.f32.mrb[0].mxu0
      %v1127 = vadd.f32 0.0, %v1126
      %v1128 = vpop.f32.mrb[0].mxu0
      %1129 = vdwg.mxu0
      %v1131 = vsel %vm372, %v950, 0
      %1133 = vmatprep.subr.mxu0 %v923
      %1134 = vmatpush1.msra.mxu0 %v922
      %1135 = vmatprep.subr.mxu0 %v935
      %1136 = vmatpush1.msra.mxu0 %v934
      %1137 = vmatprep.subr.mxu0 %v946
      %1138 = vmatpush1.msra.mxu0 %v945
      %1139 = vmatprep.subr.mxu0 0.0
      %1140 = vmatpush1.msra.mxu0 0.0
      %1141 = vmatprep.subr.mxu0 0.0
      %1142 = vmatpush1.msra.mxu0 0.0
      %1143 = vmatprep.subr.mxu0 0.0
      %1144 = vmatpush1.msra.mxu0 0.0
      %1145 = vmatprep.subr.mxu0 0.0
      %1146 = vmatpush1.msra.mxu0 0.0
      %1147 = vmatprep.subr.mxu0 0.0
      %1148 = vmatpush1.msra.mxu0 0.0
      %1149 = vmatprep.subr.mxu0 0.0
      %1150 = vmatpush1.msra.mxu0 0.0
      %1151 = vmatprep.subr.mxu0 0.0
      %1152 = vmatpush1.msra.mxu0 0.0
      %1153 = vmatprep.subr.mxu0 0.0
      %1154 = vmatpush1.msra.mxu0 0.0
      %1155 = vmatprep.subr.mxu0 0.0
      %1156 = vmatpush1.msra.mxu0 0.0
      %1157 = vmatprep.subr.mxu0 0.0
      %1158 = vmatpush1.msra.mxu0 0.0
      %1159 = vmatprep.subr.mxu0 0.0
      %1160 = vmatpush1.msra.mxu0 0.0
      %1161 = vmatprep.subr.mxu0 0.0
      %1162 = vmatpush1.msra.mxu0 0.0
      %1163 = vmatprep.subr.mxu0 0.0
      %1164 = vmatpush1.msra.mxu0 0.0
      %1165 = vmatprep.subr.mxu0 0.0
      %1166 = vmatpush1.msra.mxu0 0.0
      %1167 = vmatprep.subr.mxu0 0.0
      %1168 = vmatpush1.msra.mxu0 0.0
      %1169 = vmatprep.subr.mxu0 0.0
      %1170 = vmatpush1.msra.mxu0 0.0
      %1171 = vmatprep.subr.mxu0 0.0
      %1172 = vmatpush1.msra.mxu0 0.0
      %1173 = vmatprep.subr.mxu0 0.0
      %1174 = vmatpush1.msra.mxu0 0.0
      %1175 = vmatprep.subr.mxu0 0.0
      %1176 = vmatpush1.msra.mxu0 0.0
      %1177 = vmatprep.subr.mxu0 0.0
      %1178 = vmatpush1.msra.mxu0 0.0
      %1179 = vmatprep.subr.mxu0 0.0
      %1180 = vmatpush1.msra.mxu0 0.0
      %1181 = vmatprep.subr.mxu0 0.0
      %1182 = vmatpush1.msra.mxu0 0.0
      %1183 = vmatprep.subr.mxu0 0.0
      %1184 = vmatpush1.msra.mxu0 0.0
      %1185 = vmatprep.subr.mxu0 0.0
      %1186 = vmatpush1.msra.mxu0 0.0
      %1187 = vmatprep.subr.mxu0 0.0
      %1188 = vmatpush1.msra.mxu0 0.0
      %1189 = vmatprep.subr.mxu0 0.0
      %1190 = vmatpush1.msra.mxu0 0.0
      %1191 = vmatprep.subr.mxu0 0.0
      %1192 = vmatpush1.msra.mxu0 0.0
      %1193 = vmatprep.subr.mxu0 0.0
      %1194 = vmatpush1.msra.mxu0 0.0
      %1195 = vmatprep.subr.mxu0 0.0
      %1196 = vmatpush1.msra.mxu0 0.0
      %1197 = vmatprep.mubr.f32.mxu0 0.0
      %1198 = vmatmul.mubr.f32.gmra.mrb[0].mxu0 %v1131
      %v1199 = vpop.f32.mrb[0].mxu0
      %v1200 = vadd.f32 %v1056, %v1199
      %v1201 = vpop.f32.mrb[0].mxu0
      %v1202 = vadd.f32 %v1058, %v1201
      %1203 = vdwg.mxu0
      %1204 = vmatprep.subr.mxu0 0.0
      %1205 = vmatpush1.msra.mxu0 %v924
      %1206 = vmatprep.subr.mxu0 0.0
      %1207 = vmatpush1.msra.mxu0 %v933
      %1208 = vmatprep.subr.mxu0 0.0
      %1209 = vmatpush1.msra.mxu0 %v944
      %1210 = vmatprep.subr.mxu0 0.0
      %1211 = vmatpush1.msra.mxu0 0.0
      %1212 = vmatprep.subr.mxu0 0.0
      %1213 = vmatpush1.msra.mxu0 0.0
      %1214 = vmatprep.subr.mxu0 0.0
      %1215 = vmatpush1.msra.mxu0 0.0
      %1216 = vmatprep.subr.mxu0 0.0
      %1217 = vmatpush1.msra.mxu0 0.0
      %1218 = vmatprep.subr.mxu0 0.0
      %1219 = vmatpush1.msra.mxu0 0.0
      %1220 = vmatprep.subr.mxu0 0.0
      %1221 = vmatpush1.msra.mxu0 0.0
      %1222 = vmatprep.subr.mxu0 0.0
      %1223 = vmatpush1.msra.mxu0 0.0
      %1224 = vmatprep.subr.mxu0 0.0
      %1225 = vmatpush1.msra.mxu0 0.0
      %1226 = vmatprep.subr.mxu0 0.0
      %1227 = vmatpush1.msra.mxu0 0.0
      %1228 = vmatprep.subr.mxu0 0.0
      %1229 = vmatpush1.msra.mxu0 0.0
      %1230 = vmatprep.subr.mxu0 0.0
      %1231 = vmatpush1.msra.mxu0 0.0
      %1232 = vmatprep.subr.mxu0 0.0
      %1233 = vmatpush1.msra.mxu0 0.0
      %1234 = vmatprep.subr.mxu0 0.0
      %1235 = vmatpush1.msra.mxu0 0.0
      %1236 = vmatprep.subr.mxu0 0.0
      %1237 = vmatpush1.msra.mxu0 0.0
      %1238 = vmatprep.subr.mxu0 0.0
      %1239 = vmatpush1.msra.mxu0 0.0
      %1240 = vmatprep.subr.mxu0 0.0
      %1241 = vmatpush1.msra.mxu0 0.0
      %1242 = vmatprep.subr.mxu0 0.0
      %1243 = vmatpush1.msra.mxu0 0.0
      %1244 = vmatprep.subr.mxu0 0.0
      %1245 = vmatpush1.msra.mxu0 0.0
      %1246 = vmatprep.subr.mxu0 0.0
      %1247 = vmatpush1.msra.mxu0 0.0
      %1248 = vmatprep.subr.mxu0 0.0
      %1249 = vmatpush1.msra.mxu0 0.0
      %1250 = vmatprep.subr.mxu0 0.0
      %1251 = vmatpush1.msra.mxu0 0.0
      %1252 = vmatprep.subr.mxu0 0.0
      %1253 = vmatpush1.msra.mxu0 0.0
      %1254 = vmatprep.subr.mxu0 0.0
      %1255 = vmatpush1.msra.mxu0 0.0
      %1256 = vmatprep.subr.mxu0 0.0
      %1257 = vmatpush1.msra.mxu0 0.0
      %1258 = vmatprep.subr.mxu0 0.0
      %1259 = vmatpush1.msra.mxu0 0.0
      %1260 = vmatprep.subr.mxu0 0.0
      %1261 = vmatpush1.msra.mxu0 0.0
      %1262 = vmatprep.subr.mxu0 0.0
      %1263 = vmatpush1.msra.mxu0 0.0
      %1264 = vmatprep.subr.mxu0 0.0
      %1265 = vmatpush1.msra.mxu0 0.0
      %1266 = vmatprep.subr.mxu0 0.0
      %1267 = vmatpush1.msra.mxu0 0.0
      %1268 = vmatprep.mubr.f32.mxu0 0.0
      %1269 = vmatmul.mubr.f32.gmra.mrb[0].mxu0 %v1131
      %v1270 = vpop.f32.mrb[0].mxu0
      %v1271 = vadd.f32 %v1127, %v1270
      %v1272 = vpop.f32.mrb[0].mxu0
      %1273 = vdwg.mxu0
      %s1274 = scalar_lea.vmem %s4, 16
      %v1275 = vld [vmem:[%s1274] sm:$0xff]
      %1276 = vrot.lane.b32.xlu0 %v922, 88
      %v1277 = vpop.permute.xlu0 %1276
      %1278 = vrot.lane.b32.xlu0 %v923, 88
      %v1279 = vpop.permute.xlu0 %1278
      %1280 = vrot.lane.b32.xlu0 %v924, 88
      %v1281 = vpop.permute.xlu0 %1280
      %1282 = vrot.lane.b32.xlu0 %v934, 88
      %v1283 = vpop.permute.xlu0 %1282
      %1284 = vrot.lane.b32.xlu0 %v935, 88
      %v1285 = vpop.permute.xlu0 %1284
      %1286 = vrot.lane.b32.xlu0 %v933, 88
      %v1287 = vpop.permute.xlu0 %1286
      %1288 = vrot.lane.b32.xlu0 %v945, 88
      %v1289 = vpop.permute.xlu0 %1288
      %1290 = vrot.lane.b32.xlu0 %v946, 88
      %v1291 = vpop.permute.xlu0 %1290
      %1292 = vrot.lane.b32.xlu0 %v944, 88
      %v1293 = vpop.permute.xlu0 %1292
      %v1294 = vsel %vm717, %v1277, %v1279
      %v1295 = vsel %vm717, %v1279, %v1281
      %v1296 = vsel %vm717, %v1283, %v1285
      %v1297 = vsel %vm717, %v1285, %v1287
      %v1298 = vsel %vm717, %v1289, %v1291
      %v1299 = vsel %vm717, %v1291, %v1293
      %v1310 = vsel %vm372, %v1275, 0
      %1312 = vmatprep.subr.mxu0 %v1295
      %1313 = vmatpush1.msra.mxu0 %v1294
      %1314 = vmatprep.subr.mxu0 %v1297
      %1315 = vmatpush1.msra.mxu0 %v1296
      %1316 = vmatprep.subr.mxu0 %v1299
      %1317 = vmatpush1.msra.mxu0 %v1298
      %1318 = vmatprep.subr.mxu0 0.0
      %1319 = vmatpush1.msra.mxu0 0.0
      %1320 = vmatprep.subr.mxu0 0.0
      %1321 = vmatpush1.msra.mxu0 0.0
      %1322 = vmatprep.subr.mxu0 0.0
      %1323 = vmatpush1.msra.mxu0 0.0
      %1324 = vmatprep.subr.mxu0 0.0
      %1325 = vmatpush1.msra.mxu0 0.0
      %1326 = vmatprep.subr.mxu0 0.0
      %1327 = vmatpush1.msra.mxu0 0.0
      %1328 = vmatprep.subr.mxu0 0.0
      %1329 = vmatpush1.msra.mxu0 0.0
      %1330 = vmatprep.subr.mxu0 0.0
      %1331 = vmatpush1.msra.mxu0 0.0
      %1332 = vmatprep.subr.mxu0 0.0
      %1333 = vmatpush1.msra.mxu0 0.0
      %1334 = vmatprep.subr.mxu0 0.0
      %1335 = vmatpush1.msra.mxu0 0.0
      %1336 = vmatprep.subr.mxu0 0.0
      %1337 = vmatpush1.msra.mxu0 0.0
      %1338 = vmatprep.subr.mxu0 0.0
      %1339 = vmatpush1.msra.mxu0 0.0
      %1340 = vmatprep.subr.mxu0 0.0
      %1341 = vmatpush1.msra.mxu0 0.0
      %1342 = vmatprep.subr.mxu0 0.0
      %1343 = vmatpush1.msra.mxu0 0.0
      %1344 = vmatprep.subr.mxu0 0.0
      %1345 = vmatpush1.msra.mxu0 0.0
      %1346 = vmatprep.subr.mxu0 0.0
      %1347 = vmatpush1.msra.mxu0 0.0
      %1348 = vmatprep.subr.mxu0 0.0
      %1349 = vmatpush1.msra.mxu0 0.0
      %1350 = vmatprep.subr.mxu0 0.0
      %1351 = vmatpush1.msra.mxu0 0.0
      %1352 = vmatprep.subr.mxu0 0.0
      %1353 = vmatpush1.msra.mxu0 0.0
      %1354 = vmatprep.subr.mxu0 0.0
      %1355 = vmatpush1.msra.mxu0 0.0
      %1356 = vmatprep.subr.mxu0 0.0
      %1357 = vmatpush1.msra.mxu0 0.0
      %1358 = vmatprep.subr.mxu0 0.0
      %1359 = vmatpush1.msra.mxu0 0.0
      %1360 = vmatprep.subr.mxu0 0.0
      %1361 = vmatpush1.msra.mxu0 0.0
      %1362 = vmatprep.subr.mxu0 0.0
      %1363 = vmatpush1.msra.mxu0 0.0
      %1364 = vmatprep.subr.mxu0 0.0
      %1365 = vmatpush1.msra.mxu0 0.0
      %1366 = vmatprep.subr.mxu0 0.0
      %1367 = vmatpush1.msra.mxu0 0.0
      %1368 = vmatprep.subr.mxu0 0.0
      %1369 = vmatpush1.msra.mxu0 0.0
      %1370 = vmatprep.subr.mxu0 0.0
      %1371 = vmatpush1.msra.mxu0 0.0
      %1372 = vmatprep.subr.mxu0 0.0
      %1373 = vmatpush1.msra.mxu0 0.0
      %1374 = vmatprep.subr.mxu0 0.0
      %1375 = vmatpush1.msra.mxu0 0.0
      %1376 = vmatprep.mubr.f32.mxu0 0.0
      %1377 = vmatmul.mubr.f32.gmra.mrb[0].mxu0 %v1310
      %v1378 = vpop.f32.mrb[0].mxu0
      %v1379 = vadd.f32 0.0, %v1378
      %v1380 = vpop.f32.mrb[0].mxu0
      %v1381 = vadd.f32 0.0, %v1380
      %1382 = vdwg.mxu0
      %1383 = vmatprep.subr.mxu0 0.0
      %1384 = vmatpush1.msra.mxu0 %v1281
      %1385 = vmatprep.subr.mxu0 0.0
      %1386 = vmatpush1.msra.mxu0 %v1287
      %1387 = vmatprep.subr.mxu0 0.0
      %1388 = vmatpush1.msra.mxu0 %v1293
      %1389 = vmatprep.subr.mxu0 0.0
      %1390 = vmatpush1.msra.mxu0 0.0
      %1391 = vmatprep.subr.mxu0 0.0
      %1392 = vmatpush1.msra.mxu0 0.0
      %1393 = vmatprep.subr.mxu0 0.0
      %1394 = vmatpush1.msra.mxu0 0.0
      %1395 = vmatprep.subr.mxu0 0.0
      %1396 = vmatpush1.msra.mxu0 0.0
      %1397 = vmatprep.subr.mxu0 0.0
      %1398 = vmatpush1.msra.mxu0 0.0
      %1399 = vmatprep.subr.mxu0 0.0
      %1400 = vmatpush1.msra.mxu0 0.0
      %1401 = vmatprep.subr.mxu0 0.0
      %1402 = vmatpush1.msra.mxu0 0.0
      %1403 = vmatprep.subr.mxu0 0.0
      %1404 = vmatpush1.msra.mxu0 0.0
      %1405 = vmatprep.subr.mxu0 0.0
      %1406 = vmatpush1.msra.mxu0 0.0
      %1407 = vmatprep.subr.mxu0 0.0
      %1408 = vmatpush1.msra.mxu0 0.0
      %1409 = vmatprep.subr.mxu0 0.0
      %1410 = vmatpush1.msra.mxu0 0.0
      %1411 = vmatprep.subr.mxu0 0.0
      %1412 = vmatpush1.msra.mxu0 0.0
      %1413 = vmatprep.subr.mxu0 0.0
      %1414 = vmatpush1.msra.mxu0 0.0
      %1415 = vmatprep.subr.mxu0 0.0
      %1416 = vmatpush1.msra.mxu0 0.0
      %1417 = vmatprep.subr.mxu0 0.0
      %1418 = vmatpush1.msra.mxu0 0.0
      %1419 = vmatprep.subr.mxu0 0.0
      %1420 = vmatpush1.msra.mxu0 0.0
      %1421 = vmatprep.subr.mxu0 0.0
      %1422 = vmatpush1.msra.mxu0 0.0
      %1423 = vmatprep.subr.mxu0 0.0
      %1424 = vmatpush1.msra.mxu0 0.0
      %1425 = vmatprep.subr.mxu0 0.0
      %1426 = vmatpush1.msra.mxu0 0.0
      %1427 = vmatprep.subr.mxu0 0.0
      %1428 = vmatpush1.msra.mxu0 0.0
      %1429 = vmatprep.subr.mxu0 0.0
      %1430 = vmatpush1.msra.mxu0 0.0
      %1431 = vmatprep.subr.mxu0 0.0
      %1432 = vmatpush1.msra.mxu0 0.0
      %1433 = vmatprep.subr.mxu0 0.0
      %1434 = vmatpush1.msra.mxu0 0.0
      %1435 = vmatprep.subr.mxu0 0.0
      %1436 = vmatpush1.msra.mxu0 0.0
      %1437 = vmatprep.subr.mxu0 0.0
      %1438 = vmatpush1.msra.mxu0 0.0
      %1439 = vmatprep.subr.mxu0 0.0
      %1440 = vmatpush1.msra.mxu0 0.0
      %1441 = vmatprep.subr.mxu0 0.0
      %1442 = vmatpush1.msra.mxu0 0.0
      %1443 = vmatprep.subr.mxu0 0.0
      %1444 = vmatpush1.msra.mxu0 0.0
      %1445 = vmatprep.subr.mxu0 0.0
      %1446 = vmatpush1.msra.mxu0 0.0
      %1447 = vmatprep.mubr.f32.mxu0 0.0
      %1448 = vmatmul.mubr.f32.gmra.mrb[0].mxu0 %v1310
      %v1449 = vpop.f32.mrb[0].mxu0
      %v1450 = vadd.f32 0.0, %v1449
      %v1451 = vpop.f32.mrb[0].mxu0
      %1452 = vdwg.mxu0
      %v1453 = vadd.f32 %v1200, %v1379
      %v1454 = vadd.f32 %v1202, %v1381
      %v1455 = vadd.f32 %v1271, %v1450
      %v1456 = vld [vmem:[%s291] sm:$0xff]
      %v1457 = vld [vmem:[%s291 + $0x8] sm:$0xff]
      %v1458 = vld [vmem:[%s291 + $0x10] sm:$0xff]
      %v1459 = vld [vmem:[%s5] sm:$0xff]
      %1461 = vset.pattern.permute.xlu0 0
      %1462 = vperm.xlu0 %1461, %v1459
      %v1463 = vpop.permute.xlu0 %1462
      %v1465 = vadd.f32 %v1453, %v1463
      %v1466 = vadd.f32 %v1454, %v1463
      %v1467 = vadd.f32 %v1455, %v1463
      %1471 = vrot.lane.b32.xlu0 %v1456, 86
      %v1472 = vpop.permute.xlu0 %1471
      %1473 = vrot.lane.b32.xlu0 %v1457, 86
      %v1474 = vpop.permute.xlu0 %1473
      %1475 = vrot.lane.b32.xlu0 %v1458, 86
      %v1476 = vpop.permute.xlu0 %1475
      %vm1477 = vcmask 703488
      %v1478 = vsel %vm1477, %v1472, %v1474
      %v1479 = vsel %vm1477, %v1474, %v1476
      %v1483 = vadd.f32 %v1465, %v1478
      %v1484 = vadd.f32 %v1466, %v1479
      %v1485 = vadd.f32 %v1467, %v1476
      %1486 = vst [vmem:[%s304] sm:$0xff] %v1483
      %1487 = vst [vmem:[%s304 + $0x8] sm:$0xff] %v1484
      %vm1488 = vcmask 490496
      %1489 = vst.msk [vmem:[%s304 + $0x10] sm:$0xff] %vm1488, %v1485
      %p1490 = scmp.lt.s32.totalorder %s21, 1
      %s1491 = scalar_select %p1490, %s21, 1
      %p1492 = scmp.lt.s32.totalorder %s22, 0
      %s1493 = scalar_select %p1492, %s22, 0
      %s1494 = smul.addr %s1493, 3
      %s1495 = smul.addr %s1491, 3
      %s1496 = sadd.s32 %s1494, %s1495
      %s1497 = smul.addr %s1496, 8
      %s1498 = scalar_lea.vmem %s6, %s1497
      // Predicated region
      $region45: #{resb_forward.1} parent=43 // pred_check
        %p1499 = pneg %p187
      $region46: #{resb_forward.1} parent=43 // pred_check_branch
        %1501 = sbr.rel (%p1499) target = $region48
      $region47: #{resb_forward.1} parent=43 // pred_region
        _
      $region48: #{resb_forward.1} parent=43 // pred_fallthru
        _
    $region44: #{resb_forward.1} parent=5 // pred_fallthru
      _
    %p1502 = scmp.le.s32.totalorder 2, %s12
    // Predicated region
    $region49: #{resb_forward.1} parent=5 // pred_check
      %p1503 = pneg %p1502
    $region50: #{resb_forward.1} parent=5 // pred_check_branch
      %1505 = sbr.rel (%p1503) target = $region52
    $region51: #{resb_forward.1} parent=5 // pred_region
      %s1506 = ssub.s32 %s12, 2
      // Predicated region
      $region53: #{resb_forward.1} parent=51 // pred_check
        %p1507 = pneg %p193
      $region54: #{resb_forward.1} parent=51 // pred_check_branch
        %1509 = sbr.rel (%p1507) target = $region56
      $region55: #{resb_forward.1} parent=51 // pred_region
        %p1510 = scmp.lt.s32.totalorder %s23, 1
        %s1511 = scalar_select %p1510, %s23, 1
        %p1512 = scmp.lt.s32.totalorder %s24, 0
        %s1513 = scalar_select %p1512, %s24, 0
        %s1514 = smul.addr %s1513, 3
        %s1515 = smul.addr %s1511, 3
        %s1516 = sadd.s32 %s1514, %s1515
        %s1517 = smul.addr %s1516, 8
        %s1518 = scalar_lea.vmem %s6, %s1517
      $region56: #{resb_forward.1} parent=51 // pred_fallthru
        _
    $region52: #{resb_forward.1} parent=5 // pred_fallthru
      _
  $region6: #{resb_forward.1} parent=0 // loop_footer
    %s16 = sadd.s32 1, %s12
  $region7: #{resb_forward.1} parent=0 // loop_footer_branch
    %11 = sbr.rel target = $region3
  $region8: #{resb_forward.1} parent=0 // loop_exit
    _

</llo_original>
